<compile_context>
chip_gen: v7x
topology: tpu7x:2x2x1
jax: 0.10.0
libtpu: 0.0.40
codegen_flags: <defaults>
</compile_context>

<pallas_src>
import jax
import jax.numpy as jnp
from jax import lax
from jax.experimental import pallas as pl
from jax.experimental.pallas import tpu as pltpu


def _round_up(x, m):
    return ((x + m - 1) // m) * m


def _pad_to(a, target_shape):
    pads = [(0, t - s) for s, t in zip(a.shape, target_shape)]
    return jnp.pad(a, pads)


def _vmem_capacity_bytes():
    try:
        return int(pltpu.get_tpu_info().vmem_capacity_bytes)
    except Exception:
        return 64 << 20  # conservative (v7x per-core) fallback


def _grownet_kernel_factory(num_learners, hidden_p, unroll):
    K = num_learners
    Hp = hidden_p

    def grownet_kernel(x_ref, w1x_ref, w1f_ref, w2_ref, b2_ref,
                       o_ref, xh_ref, prev_ref):
        wdt = w1f_ref.dtype

        # (1) x-path for ALL learners in one wide MXU matmul; b1 is folded in
        #     via the appended ones column of x:
        #     xh[:, k*Hp:(k+1)*Hp] == x @ W1x_k + b1_k     (f32 accumulation)
        xh_ref[...] = jnp.dot(x_ref[...], w1x_ref[...],
                              preferred_element_type=jnp.float32)

        # Learner 0: previous feature is zero -> skip its W1f matmul entirely.
        feat0 = jnp.maximum(xh_ref[:, pl.ds(0, Hp)], 0.0)
        o_ref[...] = jnp.dot(feat0.astype(wdt), w2_ref[0],
                             preferred_element_type=jnp.float32)
        prev_ref[...] = feat0.astype(wdt)

        # (2) Sequential boosting recursion.  The previous feature is re-read
        #     from VMEM scratch (no big loop-carried vreg value) and each
        #     learner's output projection is accumulated incrementally into
        #     o_ref (1/K and mean_k b2_k are pre-folded in the wrapper).
        def body(k, carry):
            off = pl.multiple_of(k * Hp, Hp)
            h = xh_ref[:, pl.ds(off, Hp)] + jnp.dot(
                prev_ref[...], w1f_ref[k], preferred_element_type=jnp.float32)
            f = jnp.maximum(h, 0.0).astype(wdt)   # ReLU in f32, store MXU dtype
            o_ref[...] += jnp.dot(f, w2_ref[k],
                                  preferred_element_type=jnp.float32)
            prev_ref[...] = f
            return carry

        if K > 1:
            lax.fori_loop(1, K, body, 0, unroll=unroll)

        o_ref[...] = o_ref[...] + b2_ref[...]

    return grownet_kernel


def prepare_grownet_params(params, *, weights_dtype=jnp.bfloat16):
    """Fuse / pad / pre-scale the stacked learner weights.

    Call ONCE per parameter set and reuse across forward calls (it is pure
    HBM-sized reshuffling work).

    params: dict with stacked learner weights:
        w1x (K, D_in, H), w1f (K, H, H), b1 (K, 1, H),
        w2  (K, H, D_out), b2 (K, 1, D_out)
    weights_dtype: bf16 (default) halves weight DMA/VMEM and feeds the MXU its
        native operands; accumulation stays f32.  Use jnp.float32 for exact
        parity with the reference.
    """
    w1x, w1f, b1, w2, b2 = (params["w1x"], params["w1f"], params["b1"],
                            params["w2"], params["b2"])
    K, D_in, H = w1x.shape
    D_out = w2.shape[-1]
    assert K >= 1, "empty GrowNet returns None in PyTorch; nothing to run"

    Hp = _round_up(H, 128)          # hidden features live on lanes
    Dop = _round_up(D_out, 128)     # lane-dense output slab (no masked vst)
    Dxp = _round_up(D_in + 1, 8)    # x columns + ones column (folded b1)
    KHp = K * Hp

    f32 = jnp.float32
    # x-path: one wide (Dxp, K*Hp) weight; b1_k sits in the row multiplied by
    # the appended ones column of x.
    w1x_p = jnp.zeros((K, Dxp, Hp), f32)
    w1x_p = w1x_p.at[:, :D_in, :H].set(w1x.astype(f32))
    w1x_p = w1x_p.at[:, D_in, :H].set(b1.astype(f32)[:, 0, :])
    w1x_all = jnp.transpose(w1x_p, (1, 0, 2)).reshape(Dxp, KHp).astype(weights_dtype)

    w1f_p = _pad_to(w1f.astype(f32), (K, Hp, Hp)).astype(weights_dtype)
    # per-learner output projections with the ensemble mean (1/K) pre-folded.
    w2_s = (_pad_to(w2.astype(f32), (K, Hp, Dop)) * (1.0 / K)).astype(weights_dtype)
    b2_mean = _pad_to(jnp.mean(b2.astype(f32), axis=0), (1, Dop))  # stays f32

    meta = dict(K=K, D_in=D_in, H=H, D_out=D_out,
                Hp=Hp, Dop=Dop, Dxp=Dxp, KHp=KHp,
                weights_dtype=jnp.dtype(weights_dtype))
    return dict(w1x=w1x_all, w1f=w1f_p, w2=w2_s, b2=b2_mean, meta=meta)


def grownet_forward(x, prepared, *, batch_tile=None):
    """GrowNet ensemble forward pass with a single pallas_call.

    x: (B, D_in) float32
    prepared: output of prepare_grownet_params (reuse it across calls).
    """
    meta = prepared["meta"]
    K, D_in, D_out = meta["K"], meta["D_in"], meta["D_out"]
    Hp, Dop, Dxp, KHp = meta["Hp"], meta["Dop"], meta["Dxp"], meta["KHp"]
    wdt = meta["weights_dtype"]
    w_item = wdt.itemsize

    B = x.shape[0]
    Bp = _round_up(B, 8)

    # augmented input: [x | 1 | 0-pad] so b1 rides the x-path matmul for free.
    x_aug = jnp.zeros((Bp, Dxp), jnp.float32)
    x_aug = x_aug.at[:B, :D_in].set(x.astype(jnp.float32))
    x_aug = x_aug.at[:B, D_in].set(1.0)
    x_aug = x_aug.astype(wdt)

    vmem_cap = _vmem_capacity_bytes()

    # batch tile: multiple of 8; >=2 grid programs when possible (so the
    # "parallel" axis can shard across both v7x TensorCores); cap is
    # generation-aware (v7x has half the VMEM of v5e/v6e).
    if batch_tile is None:
        cap = 256 if vmem_cap <= (64 << 20) else 512
        if Bp >= 16:
            cap = min(cap, Bp // 2)
        cap = min(cap, Bp)
        tb = max(t for t in range(8, cap + 1, 8) if Bp % t == 0)
    else:
        tb = batch_tile
    assert Bp % tb == 0 and tb % 8 == 0
    grid = (Bp // tb,)

    weight_bytes = (w_item * (Dxp * KHp + K * Hp * Hp + K * Hp * Dop)
                    + 4 * Dop)                        # b2 stays f32
    act_bytes = w_item * tb * Dxp + 4 * tb * Dop      # x tile + output tile
    scratch_bytes = 4 * tb * KHp + w_item * tb * Hp   # xh slab + prev feature

    kernel = _grownet_kernel_factory(K, Hp, unroll=(K <= 8))

    def run(single_buffer_weights):
        # Weight/bias blocks have constant index_maps -> single-buffer them
        # (Buffered(1)); only x / output batch tiles stay double-buffered.
        wmode = ({"pipeline_mode": pl.Buffered(1)}
                 if single_buffer_weights else {})
        wmult = 1 if single_buffer_weights else 2
        vmem_need = (wmult * weight_bytes + 2 * act_bytes + scratch_bytes
                     + (4 << 20))
        vmem_limit = int(max(16 << 20, min(vmem_need, vmem_cap - (8 << 20))))

        return pl.pallas_call(
            kernel,
            out_shape=jax.ShapeDtypeStruct((Bp, Dop), jnp.float32),
            grid_spec=pltpu.PrefetchScalarGridSpec(
                num_scalar_prefetch=0,
                grid=grid,
                in_specs=[
                    pl.BlockSpec((tb, Dxp), lambda i: (i, 0)),               # x tile
                    pl.BlockSpec((Dxp, KHp), lambda i: (0, 0), **wmode),     # fused W1x|b1
                    pl.BlockSpec((K, Hp, Hp), lambda i: (0, 0, 0), **wmode), # W1f stack
                    pl.BlockSpec((K, Hp, Dop), lambda i: (0, 0, 0), **wmode),# W2/K stack
                    pl.BlockSpec((1, Dop), lambda i: (0, 0), **wmode),       # mean_k b2_k
                ],
                out_specs=pl.BlockSpec((tb, Dop), lambda i: (i, 0)),
                scratch_shapes=[
                    pltpu.VMEM((tb, KHp), jnp.float32),  # x-path pre-activations (f32)
                    pltpu.VMEM((tb, Hp), wdt),           # previous learner feature
                ],
            ),
            compiler_params=pltpu.CompilerParams(
                dimension_semantics=("parallel",),
                vmem_limit_bytes=vmem_limit,
            ),
        )(x_aug, prepared["w1x"], prepared["w1f"], prepared["w2"], prepared["b2"])

    try:
        out_p = run(True)
    except Exception:
        # pipeline_mode=Buffered(1) not supported on this jax build: fall back
        # to default double-buffered weight blocks (correctness unchanged).
        out_p = run(False)

    return out_p[:B, :D_out]


def grownet_reference(x, params):
    """Pure-JAX reference mirroring the PyTorch GrowNet.forward semantics."""
    w1x, w1f, b1, w2, b2 = (params["w1x"], params["w1f"], params["b1"],
                            params["w2"], params["b2"])
    K = w1x.shape[0]
    outputs = []
    last_feat = jnp.zeros((x.shape[0], w1f.shape[-1]), jnp.float32)
    for k in range(K):
        feat = jax.nn.relu(x @ w1x[k] + last_feat @ w1f[k] + b1[k])
        outputs.append(feat @ w2[k] + b2[k])
        last_feat = feat
    return jnp.mean(jnp.stack(outputs, axis=0), axis=0)


def init_params(key, num_learners, d_in, hidden, d_out):
    keys = jax.random.split(key, 5)
    scale1 = 1.0 / jnp.sqrt(d_in + hidden)
    scale2 = 1.0 / jnp.sqrt(hidden)
    return {
        "w1x": jax.random.normal(keys[0], (num_learners, d_in, hidden), jnp.float32) * scale1,
        "w1f": jax.random.normal(keys[1], (num_learners, hidden, hidden), jnp.float32) * scale1,
        "b1": jax.random.normal(keys[2], (num_learners, 1, hidden), jnp.float32) * 0.01,
        "w2": jax.random.normal(keys[3], (num_learners, hidden, d_out), jnp.float32) * scale2,
        "b2": jax.random.normal(keys[4], (num_learners, 1, d_out), jnp.float32) * 0.01,
    }


if __name__ == "__main__":
    # Small deterministic setup: 3 weak learners, batch=8, d_in=32, hidden=32, d_out=8.
    # NOTE: an empty GrowNet (0 learners) returns None in PyTorch; that trivial case
    # has no kernel to run, so we instantiate a non-empty ensemble.
    key = jax.random.PRNGKey(0)
    k_x, k_p = jax.random.split(key)

    B, D_IN, H, D_OUT, K = 8, 32, 32, 8, 3
    x = jax.random.normal(k_x, (B, D_IN), jnp.float32)
    params = init_params(k_p, K, D_IN, H, D_OUT)

    ref = grownet_reference(x, params)

    # f32 weights: numerically equivalent to the reference (tight tolerance).
    prep_f32 = prepare_grownet_params(params, weights_dtype=jnp.float32)
    out_f32 = jax.block_until_ready(grownet_forward(x, prep_f32))
    assert out_f32.shape == (B, D_OUT)
    assert jnp.allclose(out_f32, ref, atol=1e-3, rtol=1e-3), "f32 mismatch vs reference"

    # default bf16 weights: MXU-native operands; bf16 rounding -> looser tolerance.
    prep_bf16 = prepare_grownet_params(params)  # weights_dtype=jnp.bfloat16
    out_bf16 = jax.block_until_ready(grownet_forward(x, prep_bf16))
    assert out_bf16.shape == (B, D_OUT)
    assert jnp.allclose(out_bf16, ref, atol=5e-2, rtol=5e-2), "bf16 drift vs reference"

    print("KERNEL_OK")
</pallas_src>

<mosaic_0001>
module attributes {stable_mosaic.version = 11 : i64} {
  func.func @grownet_kernel(%arg0: i32, %arg1: memref<8x40xf32, #tpu.memory_space<vmem>>, %arg2: memref<40x384xf32, #tpu.memory_space<vmem>>, %arg3: memref<3x128x128xf32, #tpu.memory_space<vmem>>, %arg4: memref<3x128x128xf32, #tpu.memory_space<vmem>>, %arg5: memref<1x128xf32, #tpu.memory_space<vmem>>, %arg6: memref<8x128xf32, #tpu.memory_space<vmem>>, %arg7: memref<8x384xf32, #tpu.memory_space<vmem>>, %arg8: memref<8x128xf32, #tpu.memory_space<vmem>>) attributes {dimension_semantics = [#tpu.dimension_semantics<parallel>], iteration_bounds = array<i64: 1>, scalar_prefetch = 0 : i64, scratch_operands = 2 : i64, tpu.core_type = #tpu.core_type<tc>, window_params = [{transform_indices = @transform_0, window_bounds = array<i64: 8, 40>}, {pipeline_mode = #tpu.pipeline_mode<synchronous>, transform_indices = @transform_1, window_bounds = array<i64: 40, 384>}, {pipeline_mode = #tpu.pipeline_mode<synchronous>, transform_indices = @transform_2, window_bounds = array<i64: 3, 128, 128>}, {pipeline_mode = #tpu.pipeline_mode<synchronous>, transform_indices = @transform_3, window_bounds = array<i64: 3, 128, 128>}, {pipeline_mode = #tpu.pipeline_mode<synchronous>, transform_indices = @transform_4, window_bounds = array<i64: 1, 128>}, {transform_indices = @transform_5, window_bounds = array<i64: 8, 128>}]} {
    %c0 = arith.constant 0 : index
    %c0_0 = arith.constant 0 : index
    %0 = vector.load %arg1[%c0, %c0_0] : memref<8x40xf32, #tpu.memory_space<vmem>>, vector<8x40xf32>
    %c0_1 = arith.constant 0 : index
    %c0_2 = arith.constant 0 : index
    %1 = vector.load %arg2[%c0_1, %c0_2] : memref<40x384xf32, #tpu.memory_space<vmem>>, vector<40x384xf32>
    %cst = arith.constant dense<0.000000e+00> : vector<8x384xf32>
    %2 = tpu.matmul %0, %1, %cst {dimension_numbers = #tpu.dot_dimension_numbers<[1], [0], [0], [1], [0, 0, 1, 1], [], []>} : vector<8x40xf32>, vector<40x384xf32>, vector<8x384xf32> -> vector<8x384xf32>
    %c0_3 = arith.constant 0 : index
    %c0_4 = arith.constant 0 : index
    %3 = vector.load %arg7[%c0_3, %c0_4] : memref<8x384xf32, #tpu.memory_space<vmem>>, vector<8x384xf32>
    tpu.vector_store %arg7[%c0_3, %c0_4], %2 {strides = array<i32>} : memref<8x384xf32, #tpu.memory_space<vmem>>, vector<8x384xf32>,
    %c0_5 = arith.constant 0 : index
    %c0_6 = arith.constant 0 : index
    %4 = vector.load %arg7[%c0_5, %c0_6] : memref<8x384xf32, #tpu.memory_space<vmem>>, vector<8x128xf32>
    %cst_7 = arith.constant 0.000000e+00 : f32
    %5 = vector.broadcast %cst_7 : f32 to vector<8x128xf32>
    %6 = arith.maximumf %4, %5 : vector<8x128xf32>
    %c0_8 = arith.constant 0 : index
    %c0_9 = arith.constant 0 : index
    %c0_10 = arith.constant 0 : index
    %7 = vector.load %arg4[%c0_8, %c0_9, %c0_10] : memref<3x128x128xf32, #tpu.memory_space<vmem>>, vector<1x128x128xf32>
    %8 = vector.shape_cast %7 : vector<1x128x128xf32> to vector<128x128xf32>
    %cst_11 = arith.constant dense<0.000000e+00> : vector<8x128xf32>
    %9 = tpu.matmul %6, %8, %cst_11 {dimension_numbers = #tpu.dot_dimension_numbers<[1], [0], [0], [1], [0, 0, 1, 1], [], []>} : vector<8x128xf32>, vector<128x128xf32>, vector<8x128xf32> -> vector<8x128xf32>
    %c0_12 = arith.constant 0 : index
    %c0_13 = arith.constant 0 : index
    %10 = vector.load %arg6[%c0_12, %c0_13] : memref<8x128xf32, #tpu.memory_space<vmem>>, vector<8x128xf32>
    tpu.vector_store %arg6[%c0_12, %c0_13], %9 {strides = array<i32>} : memref<8x128xf32, #tpu.memory_space<vmem>>, vector<8x128xf32>,
    %c0_14 = arith.constant 0 : index
    %c0_15 = arith.constant 0 : index
    %11 = vector.load %arg8[%c0_14, %c0_15] : memref<8x128xf32, #tpu.memory_space<vmem>>, vector<8x128xf32>
    tpu.vector_store %arg8[%c0_14, %c0_15], %6 {strides = array<i32>} : memref<8x128xf32, #tpu.memory_space<vmem>>, vector<8x128xf32>,
    %c1_i32 = arith.constant 1 : i32
    %c128_i32 = arith.constant 128 : i32
    %12 = arith.muli %c1_i32, %c128_i32 : i32
    %13 = tpu.assume_multiple %12, 128 : i32
    %c0_16 = arith.constant 0 : index
    %14 = arith.index_cast %13 : i32 to index
    %15 = vector.load %arg7[%c0_16, %14] : memref<8x384xf32, #tpu.memory_space<vmem>>, vector<8x128xf32>
    %c0_17 = arith.constant 0 : index
    %c0_18 = arith.constant 0 : index
    %16 = vector.load %arg8[%c0_17, %c0_18] : memref<8x128xf32, #tpu.memory_space<vmem>>, vector<8x128xf32>
    %17 = arith.index_cast %c1_i32 : i32 to index
    %c0_19 = arith.constant 0 : index
    %c0_20 = arith.constant 0 : index
    %18 = vector.load %arg3[%17, %c0_19, %c0_20] : memref<3x128x128xf32, #tpu.memory_space<vmem>>, vector<1x128x128xf32>
    %19 = vector.shape_cast %18 : vector<1x128x128xf32> to vector<128x128xf32>
    %cst_21 = arith.constant dense<0.000000e+00> : vector<8x128xf32>
    %20 = tpu.matmul %16, %19, %cst_21 {dimension_numbers = #tpu.dot_dimension_numbers<[1], [0], [0], [1], [0, 0, 1, 1], [], []>} : vector<8x128xf32>, vector<128x128xf32>, vector<8x128xf32> -> vector<8x128xf32>
    %21 = arith.addf %15, %20 : vector<8x128xf32>
    %cst_22 = arith.constant 0.000000e+00 : f32
    %22 = vector.broadcast %cst_22 : f32 to vector<8x128xf32>
    %23 = arith.maximumf %21, %22 : vector<8x128xf32>
    %c0_23 = arith.constant 0 : index
    %c0_24 = arith.constant 0 : index
    %24 = vector.load %arg6[%c0_23, %c0_24] : memref<8x128xf32, #tpu.memory_space<vmem>>, vector<8x128xf32>
    %25 = arith.index_cast %c1_i32 : i32 to index
    %c0_25 = arith.constant 0 : index
    %c0_26 = arith.constant 0 : index
    %26 = vector.load %arg4[%25, %c0_25, %c0_26] : memref<3x128x128xf32, #tpu.memory_space<vmem>>, vector<1x128x128xf32>
    %27 = vector.shape_cast %26 : vector<1x128x128xf32> to vector<128x128xf32>
    %cst_27 = arith.constant dense<0.000000e+00> : vector<8x128xf32>
    %28 = tpu.matmul %23, %27, %cst_27 {dimension_numbers = #tpu.dot_dimension_numbers<[1], [0], [0], [1], [0, 0, 1, 1], [], []>} : vector<8x128xf32>, vector<128x128xf32>, vector<8x128xf32> -> vector<8x128xf32>
    %29 = arith.addf %24, %28 : vector<8x128xf32>
    %c0_28 = arith.constant 0 : index
    %c0_29 = arith.constant 0 : index
    %30 = vector.load %arg6[%c0_28, %c0_29] : memref<8x128xf32, #tpu.memory_space<vmem>>, vector<8x128xf32>
    tpu.vector_store %arg6[%c0_28, %c0_29], %29 {strides = array<i32>} : memref<8x128xf32, #tpu.memory_space<vmem>>, vector<8x128xf32>,
    %c0_30 = arith.constant 0 : index
    %c0_31 = arith.constant 0 : index
    %31 = vector.load %arg8[%c0_30, %c0_31] : memref<8x128xf32, #tpu.memory_space<vmem>>, vector<8x128xf32>
    tpu.vector_store %arg8[%c0_30, %c0_31], %23 {strides = array<i32>} : memref<8x128xf32, #tpu.memory_space<vmem>>, vector<8x128xf32>,
    %c2_i32 = arith.constant 2 : i32
    %c128_i32_32 = arith.constant 128 : i32
    %32 = arith.muli %c2_i32, %c128_i32_32 : i32
    %33 = tpu.assume_multiple %32, 128 : i32
    %c0_33 = arith.constant 0 : index
    %34 = arith.index_cast %33 : i32 to index
    %35 = vector.load %arg7[%c0_33, %34] : memref<8x384xf32, #tpu.memory_space<vmem>>, vector<8x128xf32>
    %c0_34 = arith.constant 0 : index
    %c0_35 = arith.constant 0 : index
    %36 = vector.load %arg8[%c0_34, %c0_35] : memref<8x128xf32, #tpu.memory_space<vmem>>, vector<8x128xf32>
    %37 = arith.index_cast %c2_i32 : i32 to index
    %c0_36 = arith.constant 0 : index
    %c0_37 = arith.constant 0 : index
    %38 = vector.load %arg3[%37, %c0_36, %c0_37] : memref<3x128x128xf32, #tpu.memory_space<vmem>>, vector<1x128x128xf32>
    %39 = vector.shape_cast %38 : vector<1x128x128xf32> to vector<128x128xf32>
    %cst_38 = arith.constant dense<0.000000e+00> : vector<8x128xf32>
    %40 = tpu.matmul %36, %39, %cst_38 {dimension_numbers = #tpu.dot_dimension_numbers<[1], [0], [0], [1], [0, 0, 1, 1], [], []>} : vector<8x128xf32>, vector<128x128xf32>, vector<8x128xf32> -> vector<8x128xf32>
    %41 = arith.addf %35, %40 : vector<8x128xf32>
    %cst_39 = arith.constant 0.000000e+00 : f32
    %42 = vector.broadcast %cst_39 : f32 to vector<8x128xf32>
    %43 = arith.maximumf %41, %42 : vector<8x128xf32>
    %c0_40 = arith.constant 0 : index
    %c0_41 = arith.constant 0 : index
    %44 = vector.load %arg6[%c0_40, %c0_41] : memref<8x128xf32, #tpu.memory_space<vmem>>, vector<8x128xf32>
    %45 = arith.index_cast %c2_i32 : i32 to index
    %c0_42 = arith.constant 0 : index
    %c0_43 = arith.constant 0 : index
    %46 = vector.load %arg4[%45, %c0_42, %c0_43] : memref<3x128x128xf32, #tpu.memory_space<vmem>>, vector<1x128x128xf32>
    %47 = vector.shape_cast %46 : vector<1x128x128xf32> to vector<128x128xf32>
    %cst_44 = arith.constant dense<0.000000e+00> : vector<8x128xf32>
    %48 = tpu.matmul %43, %47, %cst_44 {dimension_numbers = #tpu.dot_dimension_numbers<[1], [0], [0], [1], [0, 0, 1, 1], [], []>} : vector<8x128xf32>, vector<128x128xf32>, vector<8x128xf32> -> vector<8x128xf32>
    %49 = arith.addf %44, %48 : vector<8x128xf32>
    %c0_45 = arith.constant 0 : index
    %c0_46 = arith.constant 0 : index
    %50 = vector.load %arg6[%c0_45, %c0_46] : memref<8x128xf32, #tpu.memory_space<vmem>>, vector<8x128xf32>
    tpu.vector_store %arg6[%c0_45, %c0_46], %49 {strides = array<i32>} : memref<8x128xf32, #tpu.memory_space<vmem>>, vector<8x128xf32>,
    %c0_47 = arith.constant 0 : index
    %c0_48 = arith.constant 0 : index
    %51 = vector.load %arg8[%c0_47, %c0_48] : memref<8x128xf32, #tpu.memory_space<vmem>>, vector<8x128xf32>
    tpu.vector_store %arg8[%c0_47, %c0_48], %43 {strides = array<i32>} : memref<8x128xf32, #tpu.memory_space<vmem>>, vector<8x128xf32>,
    %c2_i32_49 = arith.constant 2 : i32
    %c0_50 = arith.constant 0 : index
    %c0_51 = arith.constant 0 : index
    %52 = vector.load %arg6[%c0_50, %c0_51] : memref<8x128xf32, #tpu.memory_space<vmem>>, vector<8x128xf32>
    %c0_52 = arith.constant 0 : index
    %c0_53 = arith.constant 0 : index
    %53 = vector.load %arg5[%c0_52, %c0_53] : memref<1x128xf32, #tpu.memory_space<vmem>>, vector<1x128xf32>
    %54 = vector.broadcast %53 : vector<1x128xf32> to vector<8x128xf32>
    %55 = arith.addf %52, %54 : vector<8x128xf32>
    %c0_54 = arith.constant 0 : index
    %c0_55 = arith.constant 0 : index
    %56 = vector.load %arg6[%c0_54, %c0_55] : memref<8x128xf32, #tpu.memory_space<vmem>>, vector<8x128xf32>
    tpu.vector_store %arg6[%c0_54, %c0_55], %55 {strides = array<i32>} : memref<8x128xf32, #tpu.memory_space<vmem>>, vector<8x128xf32>,
    return
  }
  func.func @transform_0(%arg0: i32) -> (i32, i32) {
    %c0_i32 = arith.constant 0 : i32
    %c0_i32_0 = arith.constant 0 : i32
    return %arg0, %c0_i32 : i32, i32
  }
  func.func @transform_1(%arg0: i32) -> (i32, i32) {
    %c0_i32 = arith.constant 0 : i32
    %c0_i32_0 = arith.constant 0 : i32
    %c0_i32_1 = arith.constant 0 : i32
    return %c0_i32, %c0_i32_0 : i32, i32
  }
  func.func @transform_2(%arg0: i32) -> (i32, i32, i32) {
    %c0_i32 = arith.constant 0 : i32
    %c0_i32_0 = arith.constant 0 : i32
    %c0_i32_1 = arith.constant 0 : i32
    %c0_i32_2 = arith.constant 0 : i32
    return %c0_i32, %c0_i32_0, %c0_i32_1 : i32, i32, i32
  }
  func.func @transform_3(%arg0: i32) -> (i32, i32, i32) {
    %c0_i32 = arith.constant 0 : i32
    %c0_i32_0 = arith.constant 0 : i32
    %c0_i32_1 = arith.constant 0 : i32
    %c0_i32_2 = arith.constant 0 : i32
    return %c0_i32, %c0_i32_0, %c0_i32_1 : i32, i32, i32
  }
  func.func @transform_4(%arg0: i32) -> (i32, i32) {
    %c0_i32 = arith.constant 0 : i32
    %c0_i32_0 = arith.constant 0 : i32
    %c0_i32_1 = arith.constant 0 : i32
    return %c0_i32, %c0_i32_0 : i32, i32
  }
  func.func @transform_5(%arg0: i32) -> (i32, i32) {
    %c0_i32 = arith.constant 0 : i32
    %c0_i32_0 = arith.constant 0 : i32
    return %arg0, %c0_i32 : i32, i32
  }
}

module attributes {stable_mosaic.version = 11 : i64} {
  func.func @grownet_kernel(%arg0: i32, %arg1: memref<8x40xf32, #tpu.memory_space<vmem>>, %arg2: memref<40x384xf32, #tpu.memory_space<vmem>>, %arg3: memref<3x128x128xf32, #tpu.memory_space<vmem>>, %arg4: memref<3x128x128xf32, #tpu.memory_space<vmem>>, %arg5: memref<1x128xf32, #tpu.memory_space<vmem>>, %arg6: memref<8x128xf32, #tpu.memory_space<vmem>>, %arg7: memref<8x384xf32, #tpu.memory_space<vmem>>, %arg8: memref<8x128xf32, #tpu.memory_space<vmem>>) attributes {dimension_semantics = [#tpu.dimension_semantics<parallel>], iteration_bounds = array<i64: 1>, scalar_prefetch = 0 : i64, scratch_operands = 2 : i64, tpu.core_type = #tpu.core_type<tc>, window_params = [{transform_indices = @transform_0, window_bounds = array<i64: 8, 40>}, {pipeline_mode = #tpu.pipeline_mode<synchronous>, transform_indices = @transform_1, window_bounds = array<i64: 40, 384>}, {pipeline_mode = #tpu.pipeline_mode<synchronous>, transform_indices = @transform_2, window_bounds = array<i64: 3, 128, 128>}, {pipeline_mode = #tpu.pipeline_mode<synchronous>, transform_indices = @transform_3, window_bounds = array<i64: 3, 128, 128>}, {pipeline_mode = #tpu.pipeline_mode<synchronous>, transform_indices = @transform_4, window_bounds = array<i64: 1, 128>}, {transform_indices = @transform_5, window_bounds = array<i64: 8, 128>}]} {
    %c0 = arith.constant 0 : index
    %c0_0 = arith.constant 0 : index
    %0 = vector.load %arg1[%c0, %c0_0] : memref<8x40xf32, #tpu.memory_space<vmem>>, vector<8x40xf32>
    %c0_1 = arith.constant 0 : index
    %c0_2 = arith.constant 0 : index
    %1 = vector.load %arg2[%c0_1, %c0_2] : memref<40x384xf32, #tpu.memory_space<vmem>>, vector<40x384xf32>
    %cst = arith.constant dense<0.000000e+00> : vector<8x384xf32>
    %2 = tpu.matmul %0, %1, %cst {dimension_numbers = #tpu.dot_dimension_numbers<[1], [0], [0], [1], [0, 0, 1, 1], [], []>} : vector<8x40xf32>, vector<40x384xf32>, vector<8x384xf32> -> vector<8x384xf32>
    %c0_3 = arith.constant 0 : index
    %c0_4 = arith.constant 0 : index
    %3 = vector.load %arg7[%c0_3, %c0_4] : memref<8x384xf32, #tpu.memory_space<vmem>>, vector<8x384xf32>
    tpu.vector_store %arg7[%c0_3, %c0_4], %2 {strides = array<i32>} : memref<8x384xf32, #tpu.memory_space<vmem>>, vector<8x384xf32>,
    %c0_5 = arith.constant 0 : index
    %c0_6 = arith.constant 0 : index
    %4 = vector.load %arg7[%c0_5, %c0_6] : memref<8x384xf32, #tpu.memory_space<vmem>>, vector<8x128xf32>
    %cst_7 = arith.constant 0.000000e+00 : f32
    %5 = vector.broadcast %cst_7 : f32 to vector<8x128xf32>
    %6 = arith.maximumf %4, %5 : vector<8x128xf32>
    %c0_8 = arith.constant 0 : index
    %c0_9 = arith.constant 0 : index
    %c0_10 = arith.constant 0 : index
    %7 = vector.load %arg4[%c0_8, %c0_9, %c0_10] : memref<3x128x128xf32, #tpu.memory_space<vmem>>, vector<1x128x128xf32>
    %8 = vector.shape_cast %7 : vector<1x128x128xf32> to vector<128x128xf32>
    %cst_11 = arith.constant dense<0.000000e+00> : vector<8x128xf32>
    %9 = tpu.matmul %6, %8, %cst_11 {dimension_numbers = #tpu.dot_dimension_numbers<[1], [0], [0], [1], [0, 0, 1, 1], [], []>} : vector<8x128xf32>, vector<128x128xf32>, vector<8x128xf32> -> vector<8x128xf32>
    %c0_12 = arith.constant 0 : index
    %c0_13 = arith.constant 0 : index
    %10 = vector.load %arg6[%c0_12, %c0_13] : memref<8x128xf32, #tpu.memory_space<vmem>>, vector<8x128xf32>
    tpu.vector_store %arg6[%c0_12, %c0_13], %9 {strides = array<i32>} : memref<8x128xf32, #tpu.memory_space<vmem>>, vector<8x128xf32>,
    %c0_14 = arith.constant 0 : index
    %c0_15 = arith.constant 0 : index
    %11 = vector.load %arg8[%c0_14, %c0_15] : memref<8x128xf32, #tpu.memory_space<vmem>>, vector<8x128xf32>
    tpu.vector_store %arg8[%c0_14, %c0_15], %6 {strides = array<i32>} : memref<8x128xf32, #tpu.memory_space<vmem>>, vector<8x128xf32>,
    %c1_i32 = arith.constant 1 : i32
    %c128_i32 = arith.constant 128 : i32
    %12 = arith.muli %c1_i32, %c128_i32 : i32
    %13 = tpu.assume_multiple %12, 128 : i32
    %c0_16 = arith.constant 0 : index
    %14 = arith.index_cast %13 : i32 to index
    %15 = vector.load %arg7[%c0_16, %14] : memref<8x384xf32, #tpu.memory_space<vmem>>, vector<8x128xf32>
    %c0_17 = arith.constant 0 : index
    %c0_18 = arith.constant 0 : index
    %16 = vector.load %arg8[%c0_17, %c0_18] : memref<8x128xf32, #tpu.memory_space<vmem>>, vector<8x128xf32>
    %17 = arith.index_cast %c1_i32 : i32 to index
    %c0_19 = arith.constant 0 : index
    %c0_20 = arith.constant 0 : index
    %18 = vector.load %arg3[%17, %c0_19, %c0_20] : memref<3x128x128xf32, #tpu.memory_space<vmem>>, vector<1x128x128xf32>
    %19 = vector.shape_cast %18 : vector<1x128x128xf32> to vector<128x128xf32>
    %cst_21 = arith.constant dense<0.000000e+00> : vector<8x128xf32>
    %20 = tpu.matmul %16, %19, %cst_21 {dimension_numbers = #tpu.dot_dimension_numbers<[1], [0], [0], [1], [0, 0, 1, 1], [], []>} : vector<8x128xf32>, vector<128x128xf32>, vector<8x128xf32> -> vector<8x128xf32>
    %21 = arith.addf %15, %20 : vector<8x128xf32>
    %cst_22 = arith.constant 0.000000e+00 : f32
    %22 = vector.broadcast %cst_22 : f32 to vector<8x128xf32>
    %23 = arith.maximumf %21, %22 : vector<8x128xf32>
    %c0_23 = arith.constant 0 : index
    %c0_24 = arith.constant 0 : index
    %24 = vector.load %arg6[%c0_23, %c0_24] : memref<8x128xf32, #tpu.memory_space<vmem>>, vector<8x128xf32>
    %25 = arith.index_cast %c1_i32 : i32 to index
    %c0_25 = arith.constant 0 : index
    %c0_26 = arith.constant 0 : index
    %26 = vector.load %arg4[%25, %c0_25, %c0_26] : memref<3x128x128xf32, #tpu.memory_space<vmem>>, vector<1x128x128xf32>
    %27 = vector.shape_cast %26 : vector<1x128x128xf32> to vector<128x128xf32>
    %cst_27 = arith.constant dense<0.000000e+00> : vector<8x128xf32>
    %28 = tpu.matmul %23, %27, %cst_27 {dimension_numbers = #tpu.dot_dimension_numbers<[1], [0], [0], [1], [0, 0, 1, 1], [], []>} : vector<8x128xf32>, vector<128x128xf32>, vector<8x128xf32> -> vector<8x128xf32>
    %29 = arith.addf %24, %28 : vector<8x128xf32>
    %c0_28 = arith.constant 0 : index
    %c0_29 = arith.constant 0 : index
    %30 = vector.load %arg6[%c0_28, %c0_29] : memref<8x128xf32, #tpu.memory_space<vmem>>, vector<8x128xf32>
    tpu.vector_store %arg6[%c0_28, %c0_29], %29 {strides = array<i32>} : memref<8x128xf32, #tpu.memory_space<vmem>>, vector<8x128xf32>,
    %c0_30 = arith.constant 0 : index
    %c0_31 = arith.constant 0 : index
    %31 = vector.load %arg8[%c0_30, %c0_31] : memref<8x128xf32, #tpu.memory_space<vmem>>, vector<8x128xf32>
    tpu.vector_store %arg8[%c0_30, %c0_31], %23 {strides = array<i32>} : memref<8x128xf32, #tpu.memory_space<vmem>>, vector<8x128xf32>,
    %c2_i32 = arith.constant 2 : i32
    %c128_i32_32 = arith.constant 128 : i32
    %32 = arith.muli %c2_i32, %c128_i32_32 : i32
    %33 = tpu.assume_multiple %32, 128 : i32
    %c0_33 = arith.constant 0 : index
    %34 = arith.index_cast %33 : i32 to index
    %35 = vector.load %arg7[%c0_33, %34] : memref<8x384xf32, #tpu.memory_space<vmem>>, vector<8x128xf32>
    %c0_34 = arith.constant 0 : index
    %c0_35 = arith.constant 0 : index
    %36 = vector.load %arg8[%c0_34, %c0_35] : memref<8x128xf32, #tpu.memory_space<vmem>>, vector<8x128xf32>
    %37 = arith.index_cast %c2_i32 : i32 to index
    %c0_36 = arith.constant 0 : index
    %c0_37 = arith.constant 0 : index
    %38 = vector.load %arg3[%37, %c0_36, %c0_37] : memref<3x128x128xf32, #tpu.memory_space<vmem>>, vector<1x128x128xf32>
    %39 = vector.shape_cast %38 : vector<1x128x128xf32> to vector<128x128xf32>
    %cst_38 = arith.constant dense<0.000000e+00> : vector<8x128xf32>
    %40 = tpu.matmul %36, %39, %cst_38 {dimension_numbers = #tpu.dot_dimension_numbers<[1], [0], [0], [1], [0, 0, 1, 1], [], []>} : vector<8x128xf32>, vector<128x128xf32>, vector<8x128xf32> -> vector<8x128xf32>
    %41 = arith.addf %35, %40 : vector<8x128xf32>
    %cst_39 = arith.constant 0.000000e+00 : f32
    %42 = vector.broadcast %cst_39 : f32 to vector<8x128xf32>
    %43 = arith.maximumf %41, %42 : vector<8x128xf32>
    %c0_40 = arith.constant 0 : index
    %c0_41 = arith.constant 0 : index
    %44 = vector.load %arg6[%c0_40, %c0_41] : memref<8x128xf32, #tpu.memory_space<vmem>>, vector<8x128xf32>
    %45 = arith.index_cast %c2_i32 : i32 to index
    %c0_42 = arith.constant 0 : index
    %c0_43 = arith.constant 0 : index
    %46 = vector.load %arg4[%45, %c0_42, %c0_43] : memref<3x128x128xf32, #tpu.memory_space<vmem>>, vector<1x128x128xf32>
    %47 = vector.shape_cast %46 : vector<1x128x128xf32> to vector<128x128xf32>
    %cst_44 = arith.constant dense<0.000000e+00> : vector<8x128xf32>
    %48 = tpu.matmul %43, %47, %cst_44 {dimension_numbers = #tpu.dot_dimension_numbers<[1], [0], [0], [1], [0, 0, 1, 1], [], []>} : vector<8x128xf32>, vector<128x128xf32>, vector<8x128xf32> -> vector<8x128xf32>
    %49 = arith.addf %44, %48 : vector<8x128xf32>
    %c0_45 = arith.constant 0 : index
    %c0_46 = arith.constant 0 : index
    %50 = vector.load %arg6[%c0_45, %c0_46] : memref<8x128xf32, #tpu.memory_space<vmem>>, vector<8x128xf32>
    tpu.vector_store %arg6[%c0_45, %c0_46], %49 {strides = array<i32>} : memref<8x128xf32, #tpu.memory_space<vmem>>, vector<8x128xf32>,
    %c0_47 = arith.constant 0 : index
    %c0_48 = arith.constant 0 : index
    %51 = vector.load %arg8[%c0_47, %c0_48] : memref<8x128xf32, #tpu.memory_space<vmem>>, vector<8x128xf32>
    tpu.vector_store %arg8[%c0_47, %c0_48], %43 {strides = array<i32>} : memref<8x128xf32, #tpu.memory_space<vmem>>, vector<8x128xf32>,
    %c2_i32_49 = arith.constant 2 : i32
    %c0_50 = arith.constant 0 : index
    %c0_51 = arith.constant 0 : index
    %52 = vector.load %arg6[%c0_50, %c0_51] : memref<8x128xf32, #tpu.memory_space<vmem>>, vector<8x128xf32>
    %c0_52 = arith.constant 0 : index
    %c0_53 = arith.constant 0 : index
    %53 = vector.load %arg5[%c0_52, %c0_53] : memref<1x128xf32, #tpu.memory_space<vmem>>, vector<1x128xf32>
    %54 = vector.broadcast %53 : vector<1x128xf32> to vector<8x128xf32>
    %55 = arith.addf %52, %54 : vector<8x128xf32>
    %c0_54 = arith.constant 0 : index
    %c0_55 = arith.constant 0 : index
    %56 = vector.load %arg6[%c0_54, %c0_55] : memref<8x128xf32, #tpu.memory_space<vmem>>, vector<8x128xf32>
    tpu.vector_store %arg6[%c0_54, %c0_55], %55 {strides = array<i32>} : memref<8x128xf32, #tpu.memory_space<vmem>>, vector<8x128xf32>,
    return
  }
  func.func @transform_0(%arg0: i32) -> (i32, i32) {
    %c0_i32 = arith.constant 0 : i32
    %c0_i32_0 = arith.constant 0 : i32
    return %arg0, %c0_i32 : i32, i32
  }
  func.func @transform_1(%arg0: i32) -> (i32, i32) {
    %c0_i32 = arith.constant 0 : i32
    %c0_i32_0 = arith.constant 0 : i32
    %c0_i32_1 = arith.constant 0 : i32
    return %c0_i32, %c0_i32_0 : i32, i32
  }
  func.func @transform_2(%arg0: i32) -> (i32, i32, i32) {
    %c0_i32 = arith.constant 0 : i32
    %c0_i32_0 = arith.constant 0 : i32
    %c0_i32_1 = arith.constant 0 : i32
    %c0_i32_2 = arith.constant 0 : i32
    return %c0_i32, %c0_i32_0, %c0_i32_1 : i32, i32, i32
  }
  func.func @transform_3(%arg0: i32) -> (i32, i32, i32) {
    %c0_i32 = arith.constant 0 : i32
    %c0_i32_0 = arith.constant 0 : i32
    %c0_i32_1 = arith.constant 0 : i32
    %c0_i32_2 = arith.constant 0 : i32
    return %c0_i32, %c0_i32_0, %c0_i32_1 : i32, i32, i32
  }
  func.func @transform_4(%arg0: i32) -> (i32, i32) {
    %c0_i32 = arith.constant 0 : i32
    %c0_i32_0 = arith.constant 0 : i32
    %c0_i32_1 = arith.constant 0 : i32
    return %c0_i32, %c0_i32_0 : i32, i32
  }
  func.func @transform_5(%arg0: i32) -> (i32, i32) {
    %c0_i32 = arith.constant 0 : i32
    %c0_i32_0 = arith.constant 0 : i32
    return %arg0, %c0_i32 : i32, i32
  }
}

</mosaic_0001>

<llo_original>
// kernel: tpu_custom_call.1
$region0: #{tpu_custom_call.1}
  #allocation0 [shape = 'u32[]', space=smem, size = 0x4, offset = 0x4, fixed_abs, tag = 'smem constant byte address 0x4 - core index']
  #allocation1 [shape = 'u32[144,128]{1,0:T(1,128)}', space=vmem, size = 0x12000, scoped, tag = 'internal scratch']
  #allocation2 [shape = 'f32[8,384]{1,0:T(8,128)}', space=vmem, size = 0x3000, scoped, tag = 'scratch operand']
  #allocation3 [shape = 'f32[8,128]{1,0:T(8,128)}', space=vmem, size = 0x1000, scoped, tag = 'scratch operand']
  %s0 = inlined_call_operand.hbm [shape: f32[8,40], index: 0, kind: input, shape index: {}]
  %s1 = inlined_call_operand.hbm [shape: f32[40,384], index: 1, kind: input, shape index: {}]
  %s2 = inlined_call_operand.hbm [shape: f32[3,128,128], index: 2, kind: input, shape index: {}]
  %s3 = inlined_call_operand.hbm [shape: f32[3,128,128], index: 3, kind: input, shape index: {}]
  %s4 = inlined_call_operand.vmem [shape: f32[1,128], index: 4, kind: input, shape index: {}]
  %s5 = inlined_call_operand.hbm [shape: f32[8,128], index: 5, kind: output, shape index: {}]
  %s6 = sld [smem:[#allocation0]]
  $region46: #{tpu_custom_call.1} parent=0
    _
  %s8 = ssub.s32 1, %s6
  %s9 = scalar_select 0, %s8, %s6
  $region1: #{tpu_custom_call.1} parent=0
    #allocation4 [shape = 'u8[4096]{0}', space=vmem, size = 0x1000, scoped, tag = 'input window, operand 0, single buffered']
    #allocation5 [shape = 's32[1]{0}', space=sflag, size = 0x4, scoped, tag = 'scoped memory for tpu_custom_call.1']
    #allocation6 [shape = 's32[1]{0}', space=sflag, size = 0x4, scoped, tag = 'scoped memory for tpu_custom_call.1']
    #allocation7 [shape = 'u8[61440]{0}', space=vmem, size = 0xf000, scoped, tag = 'input window, operand 1, single buffered']
    #allocation8 [shape = 's32[1]{0}', space=sflag, size = 0x4, scoped, tag = 'scoped memory for tpu_custom_call.1']
    #allocation9 [shape = 'u8[196608]{0}', space=vmem, size = 0x30000, scoped, tag = 'input window, operand 2, single buffered']
    #allocation10 [shape = 'u8[196608]{0}', space=vmem, size = 0x30000, scoped, tag = 'input window, operand 3, single buffered']
    #allocation11 [shape = 's32[1]{0}', space=sflag, size = 0x4, scoped, tag = 'scoped memory for tpu_custom_call.1']
    #allocation12 [shape = 'u8[4096]{0}', space=vmem, size = 0x1000, scoped, tag = 'output window, operand 0, single buffered']
    %10 = vsyncpa [#allocation5], 0
    %11 = vsyncpa [#allocation8], 0
    %12 = vsyncpa [#allocation11], 0
    %13 = vsyncpa [#allocation6], 0
    // Predicated region
    $region2: #{tpu_custom_call.1} parent=1 // pred_check
      _
    $region3: #{tpu_custom_call.1} parent=1 // pred_check_branch
      %15 = sbr.rel (0) target = $region5
    $region4: #{tpu_custom_call.1} parent=1 // pred_region
      %s17 = ssub.s32 128, 128
      %18 = vsyncadd [#allocation5], %s17
      %s20 = sshll.u32 [#allocation4], 4
      %s21 = int_to_ptr.vmem [resolvable:$true] %s20
      %23 = dma.hbm_to_vmem [thread:$0]  %s0, 128, %s21, [#allocation5]
    $region5: #{tpu_custom_call.1} parent=1 // pred_fallthru
      _
    // Predicated region
    $region6: #{tpu_custom_call.1} parent=1 // pred_check
      _
    $region7: #{tpu_custom_call.1} parent=1 // pred_check_branch
      %25 = sbr.rel (0) target = $region9
    $region8: #{tpu_custom_call.1} parent=1 // pred_region
      %s27 = ssub.s32 1920, 1920
      %28 = vsyncadd [#allocation8], %s27
      %s29 = sshll.u32 [#allocation7], 4
      %s30 = int_to_ptr.vmem [resolvable:$true] %s29
      %35 = dma.hbm_to_vmem [thread:$0]  %s1, 1920, %s30, [#allocation8], 384, 384, 24
    $region9: #{tpu_custom_call.1} parent=1 // pred_fallthru
      _
    // Predicated region
    $region10: #{tpu_custom_call.1} parent=1 // pred_check
      _
    $region11: #{tpu_custom_call.1} parent=1 // pred_check_branch
      %37 = sbr.rel (0) target = $region13
    $region12: #{tpu_custom_call.1} parent=1 // pred_region
      %s39 = ssub.s32 6144, 6144
      %40 = vsyncadd [#allocation8], %s39
      %s41 = sshll.u32 [#allocation9], 4
      %s42 = int_to_ptr.vmem [resolvable:$true] %s41
      %47 = dma.hbm_to_vmem [thread:$0]  %s2, 6144, %s42, [#allocation8], 128, 128, 8
    $region13: #{tpu_custom_call.1} parent=1 // pred_fallthru
      _
    // Predicated region
    $region14: #{tpu_custom_call.1} parent=1 // pred_check
      _
    $region15: #{tpu_custom_call.1} parent=1 // pred_check_branch
      %49 = sbr.rel (0) target = $region17
    $region16: #{tpu_custom_call.1} parent=1 // pred_region
      %s51 = ssub.s32 6144, 6144
      %52 = vsyncadd [#allocation11], %s51
      %s53 = sshll.u32 [#allocation10], 4
      %s54 = int_to_ptr.vmem [resolvable:$true] %s53
      %59 = dma.hbm_to_vmem [thread:$0]  %s3, 6144, %s54, [#allocation11], 128, 128, 8
    $region17: #{tpu_custom_call.1} parent=1 // pred_fallthru
      _
    // Predicated region
    $region18: #{tpu_custom_call.1} parent=1 // pred_check
      _
    $region19: #{tpu_custom_call.1} parent=1 // pred_check_branch
      %61 = sbr.rel (0) target = $region21
    $region20: #{tpu_custom_call.1} parent=1 // pred_region
      _
    $region21: #{tpu_custom_call.1} parent=1 // pred_fallthru
      _
    // Predicated region
    $region22: #{tpu_custom_call.1} parent=1 // pred_check
      _
    $region23: #{tpu_custom_call.1} parent=1 // pred_check_branch
      %63 = sbr.rel (0) target = $region25
    $region24: #{tpu_custom_call.1} parent=1 // pred_region
      %64 = dma.done [#allocation5], 128
    $region25: #{tpu_custom_call.1} parent=1 // pred_fallthru
      _
    // Predicated region
    $region26: #{tpu_custom_call.1} parent=1 // pred_check
      _
    $region27: #{tpu_custom_call.1} parent=1 // pred_check_branch
      %66 = sbr.rel (0) target = $region29
    $region28: #{tpu_custom_call.1} parent=1 // pred_region
      %67 = dma.done [#allocation8], 1920
    $region29: #{tpu_custom_call.1} parent=1 // pred_fallthru
      _
    // Predicated region
    $region30: #{tpu_custom_call.1} parent=1 // pred_check
      _
    $region31: #{tpu_custom_call.1} parent=1 // pred_check_branch
      %69 = sbr.rel (0) target = $region33
    $region32: #{tpu_custom_call.1} parent=1 // pred_region
      %70 = dma.done [#allocation8], 6144
    $region33: #{tpu_custom_call.1} parent=1 // pred_fallthru
      _
    // Predicated region
    $region34: #{tpu_custom_call.1} parent=1 // pred_check
      _
    $region35: #{tpu_custom_call.1} parent=1 // pred_check_branch
      %72 = sbr.rel (0) target = $region37
    $region36: #{tpu_custom_call.1} parent=1 // pred_region
      %73 = dma.done [#allocation11], 6144
    $region37: #{tpu_custom_call.1} parent=1 // pred_fallthru
      _
    %v74 = vld [vmem:[#allocation4] sm:$0xff]
    %v75 = vld [vmem:[#allocation7] sm:$0xff]
    %v76 = vld [vmem:[#allocation7 + $0x8] sm:$0xff]
    %v77 = vld [vmem:[#allocation7 + $0x10] sm:$0xff]
    %v78 = vld [vmem:[#allocation7 + $0x18] sm:$0xff]
    %v79 = vld [vmem:[#allocation7 + $0x20] sm:$0xff]
    %v80 = vld [vmem:[#allocation7 + $0x28] sm:$0xff]
    %v81 = vld [vmem:[#allocation7 + $0x30] sm:$0xff]
    %v82 = vld [vmem:[#allocation7 + $0x38] sm:$0xff]
    %v83 = vld [vmem:[#allocation7 + $0x40] sm:$0xff]
    %v84 = vld [vmem:[#allocation7 + $0x48] sm:$0xff]
    %v85 = vld [vmem:[#allocation7 + $0x50] sm:$0xff]
    %v86 = vld [vmem:[#allocation7 + $0x58] sm:$0xff]
    %v87 = vld [vmem:[#allocation7 + $0x60] sm:$0xff]
    %v88 = vld [vmem:[#allocation7 + $0x68] sm:$0xff]
    %v89 = vld [vmem:[#allocation7 + $0x70] sm:$0xff]
    %vm90 = vcmask 326656
    %v92 = vsel %vm90, %v74, 0
    %94 = vmatprep.subr.mxu0 %v76
    %95 = vmatpush1.msra.mxu0 %v75
    %96 = vmatprep.subr.mxu0 %v79
    %97 = vmatpush1.msra.mxu0 %v78
    %98 = vmatprep.subr.mxu0 %v82
    %99 = vmatpush1.msra.mxu0 %v81
    %100 = vmatprep.subr.mxu0 %v85
    %101 = vmatpush1.msra.mxu0 %v84
    %102 = vmatprep.subr.mxu0 %v88
    %103 = vmatpush1.msra.mxu0 %v87
    %104 = vmatprep.subr.mxu0 0.0
    %105 = vmatpush1.msra.mxu0 0.0
    %106 = vmatprep.subr.mxu0 0.0
    %107 = vmatpush1.msra.mxu0 0.0
    %108 = vmatprep.subr.mxu0 0.0
    %109 = vmatpush1.msra.mxu0 0.0
    %110 = vmatprep.subr.mxu0 0.0
    %111 = vmatpush1.msra.mxu0 0.0
    %112 = vmatprep.subr.mxu0 0.0
    %113 = vmatpush1.msra.mxu0 0.0
    %114 = vmatprep.subr.mxu0 0.0
    %115 = vmatpush1.msra.mxu0 0.0
    %116 = vmatprep.subr.mxu0 0.0
    %117 = vmatpush1.msra.mxu0 0.0
    %118 = vmatprep.subr.mxu0 0.0
    %119 = vmatpush1.msra.mxu0 0.0
    %120 = vmatprep.subr.mxu0 0.0
    %121 = vmatpush1.msra.mxu0 0.0
    %122 = vmatprep.subr.mxu0 0.0
    %123 = vmatpush1.msra.mxu0 0.0
    %124 = vmatprep.subr.mxu0 0.0
    %125 = vmatpush1.msra.mxu0 0.0
    %126 = vmatprep.subr.mxu0 0.0
    %127 = vmatpush1.msra.mxu0 0.0
    %128 = vmatprep.subr.mxu0 0.0
    %129 = vmatpush1.msra.mxu0 0.0
    %130 = vmatprep.subr.mxu0 0.0
    %131 = vmatpush1.msra.mxu0 0.0
    %132 = vmatprep.subr.mxu0 0.0
    %133 = vmatpush1.msra.mxu0 0.0
    %134 = vmatprep.subr.mxu0 0.0
    %135 = vmatpush1.msra.mxu0 0.0
    %136 = vmatprep.subr.mxu0 0.0
    %137 = vmatpush1.msra.mxu0 0.0
    %138 = vmatprep.subr.mxu0 0.0
    %139 = vmatpush1.msra.mxu0 0.0
    %140 = vmatprep.subr.mxu0 0.0
    %141 = vmatpush1.msra.mxu0 0.0
    %142 = vmatprep.subr.mxu0 0.0
    %143 = vmatpush1.msra.mxu0 0.0
    %144 = vmatprep.subr.mxu0 0.0
    %145 = vmatpush1.msra.mxu0 0.0
    %146 = vmatprep.subr.mxu0 0.0
    %147 = vmatpush1.msra.mxu0 0.0
    %148 = vmatprep.subr.mxu0 0.0
    %149 = vmatpush1.msra.mxu0 0.0
    %150 = vmatprep.subr.mxu0 0.0
    %151 = vmatpush1.msra.mxu0 0.0
    %152 = vmatprep.subr.mxu0 0.0
    %153 = vmatpush1.msra.mxu0 0.0
    %154 = vmatprep.subr.mxu0 0.0
    %155 = vmatpush1.msra.mxu0 0.0
    %156 = vmatprep.subr.mxu0 0.0
    %157 = vmatpush1.msra.mxu0 0.0
    %158 = vmatprep.mubr.f32.mxu0 0.0
    %159 = vmatmul.mubr.f32.gmra.mrb[0].mxu0 %v92
    %v160 = vpop.f32.mrb[0].mxu0
    %v161 = vadd.f32 0.0, %v160
    %v162 = vpop.f32.mrb[0].mxu0
    %v163 = vadd.f32 0.0, %v162
    %164 = vdwg.mxu0
    %165 = vmatprep.subr.mxu0 0.0
    %166 = vmatpush1.msra.mxu0 %v77
    %167 = vmatprep.subr.mxu0 0.0
    %168 = vmatpush1.msra.mxu0 %v80
    %169 = vmatprep.subr.mxu0 0.0
    %170 = vmatpush1.msra.mxu0 %v83
    %171 = vmatprep.subr.mxu0 0.0
    %172 = vmatpush1.msra.mxu0 %v86
    %173 = vmatprep.subr.mxu0 0.0
    %174 = vmatpush1.msra.mxu0 %v89
    %175 = vmatprep.subr.mxu0 0.0
    %176 = vmatpush1.msra.mxu0 0.0
    %177 = vmatprep.subr.mxu0 0.0
    %178 = vmatpush1.msra.mxu0 0.0
    %179 = vmatprep.subr.mxu0 0.0
    %180 = vmatpush1.msra.mxu0 0.0
    %181 = vmatprep.subr.mxu0 0.0
    %182 = vmatpush1.msra.mxu0 0.0
    %183 = vmatprep.subr.mxu0 0.0
    %184 = vmatpush1.msra.mxu0 0.0
    %185 = vmatprep.subr.mxu0 0.0
    %186 = vmatpush1.msra.mxu0 0.0
    %187 = vmatprep.subr.mxu0 0.0
    %188 = vmatpush1.msra.mxu0 0.0
    %189 = vmatprep.subr.mxu0 0.0
    %190 = vmatpush1.msra.mxu0 0.0
    %191 = vmatprep.subr.mxu0 0.0
    %192 = vmatpush1.msra.mxu0 0.0
    %193 = vmatprep.subr.mxu0 0.0
    %194 = vmatpush1.msra.mxu0 0.0
    %195 = vmatprep.subr.mxu0 0.0
    %196 = vmatpush1.msra.mxu0 0.0
    %197 = vmatprep.subr.mxu0 0.0
    %198 = vmatpush1.msra.mxu0 0.0
    %199 = vmatprep.subr.mxu0 0.0
    %200 = vmatpush1.msra.mxu0 0.0
    %201 = vmatprep.subr.mxu0 0.0
    %202 = vmatpush1.msra.mxu0 0.0
    %203 = vmatprep.subr.mxu0 0.0
    %204 = vmatpush1.msra.mxu0 0.0
    %205 = vmatprep.subr.mxu0 0.0
    %206 = vmatpush1.msra.mxu0 0.0
    %207 = vmatprep.subr.mxu0 0.0
    %208 = vmatpush1.msra.mxu0 0.0
    %209 = vmatprep.subr.mxu0 0.0
    %210 = vmatpush1.msra.mxu0 0.0
    %211 = vmatprep.subr.mxu0 0.0
    %212 = vmatpush1.msra.mxu0 0.0
    %213 = vmatprep.subr.mxu0 0.0
    %214 = vmatpush1.msra.mxu0 0.0
    %215 = vmatprep.subr.mxu0 0.0
    %216 = vmatpush1.msra.mxu0 0.0
    %217 = vmatprep.subr.mxu0 0.0
    %218 = vmatpush1.msra.mxu0 0.0
    %219 = vmatprep.subr.mxu0 0.0
    %220 = vmatpush1.msra.mxu0 0.0
    %221 = vmatprep.subr.mxu0 0.0
    %222 = vmatpush1.msra.mxu0 0.0
    %223 = vmatprep.subr.mxu0 0.0
    %224 = vmatpush1.msra.mxu0 0.0
    %225 = vmatprep.subr.mxu0 0.0
    %226 = vmatpush1.msra.mxu0 0.0
    %227 = vmatprep.subr.mxu0 0.0
    %228 = vmatpush1.msra.mxu0 0.0
    %229 = vmatprep.mubr.f32.mxu0 0.0
    %230 = vmatmul.mubr.f32.gmra.mrb[0].mxu0 %v92
    %v231 = vpop.f32.mrb[0].mxu0
    %v232 = vadd.f32 0.0, %v231
    %v233 = vpop.f32.mrb[0].mxu0
    %234 = vdwg.mxu0
    %235 = vst [vmem:[#allocation2] sm:$0xff] %v161
    %236 = vst [vmem:[#allocation2 + $0x8] sm:$0xff] %v163
    %237 = vst [vmem:[#allocation2 + $0x10] sm:$0xff] %v232
    %v238 = vld [vmem:[#allocation2] sm:$0xff]
    %v239 = vmax.f32 %v238, 0.0
    %v240 = vld [vmem:[#allocation10] sm:$0xff]
    %v241 = vld [vmem:[#allocation10 + $0x8] sm:$0xff]
    %v242 = vld [vmem:[#allocation10 + $0x10] sm:$0xff]
    %v243 = vld [vmem:[#allocation10 + $0x18] sm:$0xff]
    %v244 = vld [vmem:[#allocation10 + $0x20] sm:$0xff]
    %v245 = vld [vmem:[#allocation10 + $0x28] sm:$0xff]
    %v246 = vld [vmem:[#allocation10 + $0x30] sm:$0xff]
    %v247 = vld [vmem:[#allocation10 + $0x38] sm:$0xff]
    %v248 = vld [vmem:[#allocation10 + $0x40] sm:$0xff]
    %v249 = vld [vmem:[#allocation10 + $0x48] sm:$0xff]
    %v250 = vld [vmem:[#allocation10 + $0x50] sm:$0xff]
    %v251 = vld [vmem:[#allocation10 + $0x58] sm:$0xff]
    %v252 = vld [vmem:[#allocation10 + $0x60] sm:$0xff]
    %v253 = vld [vmem:[#allocation10 + $0x68] sm:$0xff]
    %v254 = vld [vmem:[#allocation10 + $0x70] sm:$0xff]
    %v255 = vld [vmem:[#allocation10 + $0x78] sm:$0xff]
    %256 = vmatprep.subr.mxu0 0.0
    %257 = vmatpush1.msra.mxu0 %v240
    %258 = vmatprep.subr.mxu0 0.0
    %259 = vmatpush1.msra.mxu0 %v241
    %260 = vmatprep.subr.mxu0 0.0
    %261 = vmatpush1.msra.mxu0 %v242
    %262 = vmatprep.subr.mxu0 0.0
    %263 = vmatpush1.msra.mxu0 %v243
    %264 = vmatprep.subr.mxu0 0.0
    %265 = vmatpush1.msra.mxu0 %v244
    %266 = vmatprep.subr.mxu0 0.0
    %267 = vmatpush1.msra.mxu0 %v245
    %268 = vmatprep.subr.mxu0 0.0
    %269 = vmatpush1.msra.mxu0 %v246
    %270 = vmatprep.subr.mxu0 0.0
    %271 = vmatpush1.msra.mxu0 %v247
    %272 = vmatprep.subr.mxu0 0.0
    %273 = vmatpush1.msra.mxu0 %v248
    %274 = vmatprep.subr.mxu0 0.0
    %275 = vmatpush1.msra.mxu0 %v249
    %276 = vmatprep.subr.mxu0 0.0
    %277 = vmatpush1.msra.mxu0 %v250
    %278 = vmatprep.subr.mxu0 0.0
    %279 = vmatpush1.msra.mxu0 %v251
    %280 = vmatprep.subr.mxu0 0.0
    %281 = vmatpush1.msra.mxu0 %v252
    %282 = vmatprep.subr.mxu0 0.0
    %283 = vmatpush1.msra.mxu0 %v253
    %284 = vmatprep.subr.mxu0 0.0
    %285 = vmatpush1.msra.mxu0 %v254
    %286 = vmatprep.subr.mxu0 0.0
    %287 = vmatpush1.msra.mxu0 %v255
    %288 = vmatprep.subr.mxu0 0.0
    %289 = vmatpush1.msra.mxu0 0.0
    %290 = vmatprep.subr.mxu0 0.0
    %291 = vmatpush1.msra.mxu0 0.0
    %292 = vmatprep.subr.mxu0 0.0
    %293 = vmatpush1.msra.mxu0 0.0
    %294 = vmatprep.subr.mxu0 0.0
    %295 = vmatpush1.msra.mxu0 0.0
    %296 = vmatprep.subr.mxu0 0.0
    %297 = vmatpush1.msra.mxu0 0.0
    %298 = vmatprep.subr.mxu0 0.0
    %299 = vmatpush1.msra.mxu0 0.0
    %300 = vmatprep.subr.mxu0 0.0
    %301 = vmatpush1.msra.mxu0 0.0
    %302 = vmatprep.subr.mxu0 0.0
    %303 = vmatpush1.msra.mxu0 0.0
    %304 = vmatprep.subr.mxu0 0.0
    %305 = vmatpush1.msra.mxu0 0.0
    %306 = vmatprep.subr.mxu0 0.0
    %307 = vmatpush1.msra.mxu0 0.0
    %308 = vmatprep.subr.mxu0 0.0
    %309 = vmatpush1.msra.mxu0 0.0
    %310 = vmatprep.subr.mxu0 0.0
    %311 = vmatpush1.msra.mxu0 0.0
    %312 = vmatprep.subr.mxu0 0.0
    %313 = vmatpush1.msra.mxu0 0.0
    %314 = vmatprep.subr.mxu0 0.0
    %315 = vmatpush1.msra.mxu0 0.0
    %316 = vmatprep.subr.mxu0 0.0
    %317 = vmatpush1.msra.mxu0 0.0
    %318 = vmatprep.subr.mxu0 0.0
    %319 = vmatpush1.msra.mxu0 0.0
    %320 = vmatprep.mubr.f32.mxu0 0.0
    %321 = vmatmul.mubr.f32.gmra.mrb[0].mxu0 %v239
    %v322 = vpop.f32.mrb[0].mxu0
    %v323 = vadd.f32 0.0, %v322
    %v324 = vpop.f32.mrb[0].mxu0
    %325 = vdwg.mxu0
    %326 = vst [vmem:[#allocation12] sm:$0xff] %v323
    %327 = vst [vmem:[#allocation3] sm:$0xff] %v239
    %s328 = scalar_lea.vmem [#allocation2], 8
    %v329 = vld [vmem:[%s328] sm:$0xff]
    %v330 = vld [vmem:[#allocation3] sm:$0xff]
    %s331 = scalar_lea.vmem [#allocation9], 128
    %v332 = vld [vmem:[%s331] sm:$0xff]
    %v333 = vld [vmem:[%s331 + $0x8] sm:$0xff]
    %v334 = vld [vmem:[%s331 + $0x10] sm:$0xff]
    %v335 = vld [vmem:[%s331 + $0x18] sm:$0xff]
    %v336 = vld [vmem:[%s331 + $0x20] sm:$0xff]
    %v337 = vld [vmem:[%s331 + $0x28] sm:$0xff]
    %v338 = vld [vmem:[%s331 + $0x30] sm:$0xff]
    %v339 = vld [vmem:[%s331 + $0x38] sm:$0xff]
    %v340 = vld [vmem:[%s331 + $0x40] sm:$0xff]
    %v341 = vld [vmem:[%s331 + $0x48] sm:$0xff]
    %v342 = vld [vmem:[%s331 + $0x50] sm:$0xff]
    %v343 = vld [vmem:[%s331 + $0x58] sm:$0xff]
    %v344 = vld [vmem:[%s331 + $0x60] sm:$0xff]
    %v345 = vld [vmem:[%s331 + $0x68] sm:$0xff]
    %v346 = vld [vmem:[%s331 + $0x70] sm:$0xff]
    %v347 = vld [vmem:[%s331 + $0x78] sm:$0xff]
    %348 = vmatprep.subr.mxu0 0.0
    %349 = vmatpush1.msra.mxu0 %v332
    %350 = vmatprep.subr.mxu0 0.0
    %351 = vmatpush1.msra.mxu0 %v333
    %352 = vmatprep.subr.mxu0 0.0
    %353 = vmatpush1.msra.mxu0 %v334
    %354 = vmatprep.subr.mxu0 0.0
    %355 = vmatpush1.msra.mxu0 %v335
    %356 = vmatprep.subr.mxu0 0.0
    %357 = vmatpush1.msra.mxu0 %v336
    %358 = vmatprep.subr.mxu0 0.0
    %359 = vmatpush1.msra.mxu0 %v337
    %360 = vmatprep.subr.mxu0 0.0
    %361 = vmatpush1.msra.mxu0 %v338
    %362 = vmatprep.subr.mxu0 0.0
    %363 = vmatpush1.msra.mxu0 %v339
    %364 = vmatprep.subr.mxu0 0.0
    %365 = vmatpush1.msra.mxu0 %v340
    %366 = vmatprep.subr.mxu0 0.0
    %367 = vmatpush1.msra.mxu0 %v341
    %368 = vmatprep.subr.mxu0 0.0
    %369 = vmatpush1.msra.mxu0 %v342
    %370 = vmatprep.subr.mxu0 0.0
    %371 = vmatpush1.msra.mxu0 %v343
    %372 = vmatprep.subr.mxu0 0.0
    %373 = vmatpush1.msra.mxu0 %v344
    %374 = vmatprep.subr.mxu0 0.0
    %375 = vmatpush1.msra.mxu0 %v345
    %376 = vmatprep.subr.mxu0 0.0
    %377 = vmatpush1.msra.mxu0 %v346
    %378 = vmatprep.subr.mxu0 0.0
    %379 = vmatpush1.msra.mxu0 %v347
    %380 = vmatprep.subr.mxu0 0.0
    %381 = vmatpush1.msra.mxu0 0.0
    %382 = vmatprep.subr.mxu0 0.0
    %383 = vmatpush1.msra.mxu0 0.0
    %384 = vmatprep.subr.mxu0 0.0
    %385 = vmatpush1.msra.mxu0 0.0
    %386 = vmatprep.subr.mxu0 0.0
    %387 = vmatpush1.msra.mxu0 0.0
    %388 = vmatprep.subr.mxu0 0.0
    %389 = vmatpush1.msra.mxu0 0.0
    %390 = vmatprep.subr.mxu0 0.0
    %391 = vmatpush1.msra.mxu0 0.0
    %392 = vmatprep.subr.mxu0 0.0
    %393 = vmatpush1.msra.mxu0 0.0
    %394 = vmatprep.subr.mxu0 0.0
    %395 = vmatpush1.msra.mxu0 0.0
    %396 = vmatprep.subr.mxu0 0.0
    %397 = vmatpush1.msra.mxu0 0.0
    %398 = vmatprep.subr.mxu0 0.0
    %399 = vmatpush1.msra.mxu0 0.0
    %400 = vmatprep.subr.mxu0 0.0
    %401 = vmatpush1.msra.mxu0 0.0
    %402 = vmatprep.subr.mxu0 0.0
    %403 = vmatpush1.msra.mxu0 0.0
    %404 = vmatprep.subr.mxu0 0.0
    %405 = vmatpush1.msra.mxu0 0.0
    %406 = vmatprep.subr.mxu0 0.0
    %407 = vmatpush1.msra.mxu0 0.0
    %408 = vmatprep.subr.mxu0 0.0
    %409 = vmatpush1.msra.mxu0 0.0
    %410 = vmatprep.subr.mxu0 0.0
    %411 = vmatpush1.msra.mxu0 0.0
    %412 = vmatprep.mubr.f32.mxu0 0.0
    %413 = vmatmul.mubr.f32.gmra.mrb[0].mxu0 %v330
    %v414 = vpop.f32.mrb[0].mxu0
    %v415 = vadd.f32 0.0, %v414
    %v416 = vpop.f32.mrb[0].mxu0
    %417 = vdwg.mxu0
    %v418 = vadd.f32 %v329, %v415
    %v419 = vmax.f32 %v418, 0.0
    %v420 = vld [vmem:[#allocation12] sm:$0xff]
    %s421 = scalar_lea.vmem [#allocation10], 128
    %v422 = vld [vmem:[%s421] sm:$0xff]
    %v423 = vld [vmem:[%s421 + $0x8] sm:$0xff]
    %v424 = vld [vmem:[%s421 + $0x10] sm:$0xff]
    %v425 = vld [vmem:[%s421 + $0x18] sm:$0xff]
    %v426 = vld [vmem:[%s421 + $0x20] sm:$0xff]
    %v427 = vld [vmem:[%s421 + $0x28] sm:$0xff]
    %v428 = vld [vmem:[%s421 + $0x30] sm:$0xff]
    %v429 = vld [vmem:[%s421 + $0x38] sm:$0xff]
    %v430 = vld [vmem:[%s421 + $0x40] sm:$0xff]
    %v431 = vld [vmem:[%s421 + $0x48] sm:$0xff]
    %v432 = vld [vmem:[%s421 + $0x50] sm:$0xff]
    %v433 = vld [vmem:[%s421 + $0x58] sm:$0xff]
    %v434 = vld [vmem:[%s421 + $0x60] sm:$0xff]
    %v435 = vld [vmem:[%s421 + $0x68] sm:$0xff]
    %v436 = vld [vmem:[%s421 + $0x70] sm:$0xff]
    %v437 = vld [vmem:[%s421 + $0x78] sm:$0xff]
    %438 = vmatprep.subr.mxu0 0.0
    %439 = vmatpush1.msra.mxu0 %v422
    %440 = vmatprep.subr.mxu0 0.0
    %441 = vmatpush1.msra.mxu0 %v423
    %442 = vmatprep.subr.mxu0 0.0
    %443 = vmatpush1.msra.mxu0 %v424
    %444 = vmatprep.subr.mxu0 0.0
    %445 = vmatpush1.msra.mxu0 %v425
    %446 = vmatprep.subr.mxu0 0.0
    %447 = vmatpush1.msra.mxu0 %v426
    %448 = vmatprep.subr.mxu0 0.0
    %449 = vmatpush1.msra.mxu0 %v427
    %450 = vmatprep.subr.mxu0 0.0
    %451 = vmatpush1.msra.mxu0 %v428
    %452 = vmatprep.subr.mxu0 0.0
    %453 = vmatpush1.msra.mxu0 %v429
    %454 = vmatprep.subr.mxu0 0.0
    %455 = vmatpush1.msra.mxu0 %v430
    %456 = vmatprep.subr.mxu0 0.0
    %457 = vmatpush1.msra.mxu0 %v431
    %458 = vmatprep.subr.mxu0 0.0
    %459 = vmatpush1.msra.mxu0 %v432
    %460 = vmatprep.subr.mxu0 0.0
    %461 = vmatpush1.msra.mxu0 %v433
    %462 = vmatprep.subr.mxu0 0.0
    %463 = vmatpush1.msra.mxu0 %v434
    %464 = vmatprep.subr.mxu0 0.0
    %465 = vmatpush1.msra.mxu0 %v435
    %466 = vmatprep.subr.mxu0 0.0
    %467 = vmatpush1.msra.mxu0 %v436
    %468 = vmatprep.subr.mxu0 0.0
    %469 = vmatpush1.msra.mxu0 %v437
    %470 = vmatprep.subr.mxu0 0.0
    %471 = vmatpush1.msra.mxu0 0.0
    %472 = vmatprep.subr.mxu0 0.0
    %473 = vmatpush1.msra.mxu0 0.0
    %474 = vmatprep.subr.mxu0 0.0
    %475 = vmatpush1.msra.mxu0 0.0
    %476 = vmatprep.subr.mxu0 0.0
    %477 = vmatpush1.msra.mxu0 0.0
    %478 = vmatprep.subr.mxu0 0.0
    %479 = vmatpush1.msra.mxu0 0.0
    %480 = vmatprep.subr.mxu0 0.0
    %481 = vmatpush1.msra.mxu0 0.0
    %482 = vmatprep.subr.mxu0 0.0
    %483 = vmatpush1.msra.mxu0 0.0
    %484 = vmatprep.subr.mxu0 0.0
    %485 = vmatpush1.msra.mxu0 0.0
    %486 = vmatprep.subr.mxu0 0.0
    %487 = vmatpush1.msra.mxu0 0.0
    %488 = vmatprep.subr.mxu0 0.0
    %489 = vmatpush1.msra.mxu0 0.0
    %490 = vmatprep.subr.mxu0 0.0
    %491 = vmatpush1.msra.mxu0 0.0
    %492 = vmatprep.subr.mxu0 0.0
    %493 = vmatpush1.msra.mxu0 0.0
    %494 = vmatprep.subr.mxu0 0.0
    %495 = vmatpush1.msra.mxu0 0.0
    %496 = vmatprep.subr.mxu0 0.0
    %497 = vmatpush1.msra.mxu0 0.0
    %498 = vmatprep.subr.mxu0 0.0
    %499 = vmatpush1.msra.mxu0 0.0
    %500 = vmatprep.subr.mxu0 0.0
    %501 = vmatpush1.msra.mxu0 0.0
    %502 = vmatprep.mubr.f32.mxu0 0.0
    %503 = vmatmul.mubr.f32.gmra.mrb[0].mxu0 %v419
    %v504 = vpop.f32.mrb[0].mxu0
    %v505 = vadd.f32 0.0, %v504
    %v506 = vpop.f32.mrb[0].mxu0
    %507 = vdwg.mxu0
    %v508 = vadd.f32 %v420, %v505
    %509 = vst [vmem:[#allocation12] sm:$0xff] %v508
    %510 = vst [vmem:[#allocation3] sm:$0xff] %v419
    %s511 = scalar_lea.vmem [#allocation2], 16
    %v512 = vld [vmem:[%s511] sm:$0xff]
    %v513 = vld [vmem:[#allocation3] sm:$0xff]
    %s514 = scalar_lea.vmem [#allocation9], 256
    %v515 = vld [vmem:[%s514] sm:$0xff]
    %v516 = vld [vmem:[%s514 + $0x8] sm:$0xff]
    %v517 = vld [vmem:[%s514 + $0x10] sm:$0xff]
    %v518 = vld [vmem:[%s514 + $0x18] sm:$0xff]
    %v519 = vld [vmem:[%s514 + $0x20] sm:$0xff]
    %v520 = vld [vmem:[%s514 + $0x28] sm:$0xff]
    %v521 = vld [vmem:[%s514 + $0x30] sm:$0xff]
    %v522 = vld [vmem:[%s514 + $0x38] sm:$0xff]
    %v523 = vld [vmem:[%s514 + $0x40] sm:$0xff]
    %v524 = vld [vmem:[%s514 + $0x48] sm:$0xff]
    %v525 = vld [vmem:[%s514 + $0x50] sm:$0xff]
    %v526 = vld [vmem:[%s514 + $0x58] sm:$0xff]
    %v527 = vld [vmem:[%s514 + $0x60] sm:$0xff]
    %v528 = vld [vmem:[%s514 + $0x68] sm:$0xff]
    %v529 = vld [vmem:[%s514 + $0x70] sm:$0xff]
    %v530 = vld [vmem:[%s514 + $0x78] sm:$0xff]
    %531 = vmatprep.subr.mxu0 0.0
    %532 = vmatpush1.msra.mxu0 %v515
    %533 = vmatprep.subr.mxu0 0.0
    %534 = vmatpush1.msra.mxu0 %v516
    %535 = vmatprep.subr.mxu0 0.0
    %536 = vmatpush1.msra.mxu0 %v517
    %537 = vmatprep.subr.mxu0 0.0
    %538 = vmatpush1.msra.mxu0 %v518
    %539 = vmatprep.subr.mxu0 0.0
    %540 = vmatpush1.msra.mxu0 %v519
    %541 = vmatprep.subr.mxu0 0.0
    %542 = vmatpush1.msra.mxu0 %v520
    %543 = vmatprep.subr.mxu0 0.0
    %544 = vmatpush1.msra.mxu0 %v521
    %545 = vmatprep.subr.mxu0 0.0
    %546 = vmatpush1.msra.mxu0 %v522
    %547 = vmatprep.subr.mxu0 0.0
    %548 = vmatpush1.msra.mxu0 %v523
    %549 = vmatprep.subr.mxu0 0.0
    %550 = vmatpush1.msra.mxu0 %v524
    %551 = vmatprep.subr.mxu0 0.0
    %552 = vmatpush1.msra.mxu0 %v525
    %553 = vmatprep.subr.mxu0 0.0
    %554 = vmatpush1.msra.mxu0 %v526
    %555 = vmatprep.subr.mxu0 0.0
    %556 = vmatpush1.msra.mxu0 %v527
    %557 = vmatprep.subr.mxu0 0.0
    %558 = vmatpush1.msra.mxu0 %v528
    %559 = vmatprep.subr.mxu0 0.0
    %560 = vmatpush1.msra.mxu0 %v529
    %561 = vmatprep.subr.mxu0 0.0
    %562 = vmatpush1.msra.mxu0 %v530
    %563 = vmatprep.subr.mxu0 0.0
    %564 = vmatpush1.msra.mxu0 0.0
    %565 = vmatprep.subr.mxu0 0.0
    %566 = vmatpush1.msra.mxu0 0.0
    %567 = vmatprep.subr.mxu0 0.0
    %568 = vmatpush1.msra.mxu0 0.0
    %569 = vmatprep.subr.mxu0 0.0
    %570 = vmatpush1.msra.mxu0 0.0
    %571 = vmatprep.subr.mxu0 0.0
    %572 = vmatpush1.msra.mxu0 0.0
    %573 = vmatprep.subr.mxu0 0.0
    %574 = vmatpush1.msra.mxu0 0.0
    %575 = vmatprep.subr.mxu0 0.0
    %576 = vmatpush1.msra.mxu0 0.0
    %577 = vmatprep.subr.mxu0 0.0
    %578 = vmatpush1.msra.mxu0 0.0
    %579 = vmatprep.subr.mxu0 0.0
    %580 = vmatpush1.msra.mxu0 0.0
    %581 = vmatprep.subr.mxu0 0.0
    %582 = vmatpush1.msra.mxu0 0.0
    %583 = vmatprep.subr.mxu0 0.0
    %584 = vmatpush1.msra.mxu0 0.0
    %585 = vmatprep.subr.mxu0 0.0
    %586 = vmatpush1.msra.mxu0 0.0
    %587 = vmatprep.subr.mxu0 0.0
    %588 = vmatpush1.msra.mxu0 0.0
    %589 = vmatprep.subr.mxu0 0.0
    %590 = vmatpush1.msra.mxu0 0.0
    %591 = vmatprep.subr.mxu0 0.0
    %592 = vmatpush1.msra.mxu0 0.0
    %593 = vmatprep.subr.mxu0 0.0
    %594 = vmatpush1.msra.mxu0 0.0
    %595 = vmatprep.mubr.f32.mxu0 0.0
    %596 = vmatmul.mubr.f32.gmra.mrb[0].mxu0 %v513
    %v597 = vpop.f32.mrb[0].mxu0
    %v598 = vadd.f32 0.0, %v597
    %v599 = vpop.f32.mrb[0].mxu0
    %600 = vdwg.mxu0
    %v601 = vadd.f32 %v512, %v598
    %v602 = vmax.f32 %v601, 0.0
    %v603 = vld [vmem:[#allocation12] sm:$0xff]
    %s604 = scalar_lea.vmem [#allocation10], 256
    %v605 = vld [vmem:[%s604] sm:$0xff]
    %v606 = vld [vmem:[%s604 + $0x8] sm:$0xff]
    %v607 = vld [vmem:[%s604 + $0x10] sm:$0xff]
    %v608 = vld [vmem:[%s604 + $0x18] sm:$0xff]
    %v609 = vld [vmem:[%s604 + $0x20] sm:$0xff]
    %v610 = vld [vmem:[%s604 + $0x28] sm:$0xff]
    %v611 = vld [vmem:[%s604 + $0x30] sm:$0xff]
    %v612 = vld [vmem:[%s604 + $0x38] sm:$0xff]
    %v613 = vld [vmem:[%s604 + $0x40] sm:$0xff]
    %v614 = vld [vmem:[%s604 + $0x48] sm:$0xff]
    %v615 = vld [vmem:[%s604 + $0x50] sm:$0xff]
    %v616 = vld [vmem:[%s604 + $0x58] sm:$0xff]
    %v617 = vld [vmem:[%s604 + $0x60] sm:$0xff]
    %v618 = vld [vmem:[%s604 + $0x68] sm:$0xff]
    %v619 = vld [vmem:[%s604 + $0x70] sm:$0xff]
    %v620 = vld [vmem:[%s604 + $0x78] sm:$0xff]
    %621 = vmatprep.subr.mxu0 0.0
    %622 = vmatpush1.msra.mxu0 %v605
    %623 = vmatprep.subr.mxu0 0.0
    %624 = vmatpush1.msra.mxu0 %v606
    %625 = vmatprep.subr.mxu0 0.0
    %626 = vmatpush1.msra.mxu0 %v607
    %627 = vmatprep.subr.mxu0 0.0
    %628 = vmatpush1.msra.mxu0 %v608
    %629 = vmatprep.subr.mxu0 0.0
    %630 = vmatpush1.msra.mxu0 %v609
    %631 = vmatprep.subr.mxu0 0.0
    %632 = vmatpush1.msra.mxu0 %v610
    %633 = vmatprep.subr.mxu0 0.0
    %634 = vmatpush1.msra.mxu0 %v611
    %635 = vmatprep.subr.mxu0 0.0
    %636 = vmatpush1.msra.mxu0 %v612
    %637 = vmatprep.subr.mxu0 0.0
    %638 = vmatpush1.msra.mxu0 %v613
    %639 = vmatprep.subr.mxu0 0.0
    %640 = vmatpush1.msra.mxu0 %v614
    %641 = vmatprep.subr.mxu0 0.0
    %642 = vmatpush1.msra.mxu0 %v615
    %643 = vmatprep.subr.mxu0 0.0
    %644 = vmatpush1.msra.mxu0 %v616
    %645 = vmatprep.subr.mxu0 0.0
    %646 = vmatpush1.msra.mxu0 %v617
    %647 = vmatprep.subr.mxu0 0.0
    %648 = vmatpush1.msra.mxu0 %v618
    %649 = vmatprep.subr.mxu0 0.0
    %650 = vmatpush1.msra.mxu0 %v619
    %651 = vmatprep.subr.mxu0 0.0
    %652 = vmatpush1.msra.mxu0 %v620
    %653 = vmatprep.subr.mxu0 0.0
    %654 = vmatpush1.msra.mxu0 0.0
    %655 = vmatprep.subr.mxu0 0.0
    %656 = vmatpush1.msra.mxu0 0.0
    %657 = vmatprep.subr.mxu0 0.0
    %658 = vmatpush1.msra.mxu0 0.0
    %659 = vmatprep.subr.mxu0 0.0
    %660 = vmatpush1.msra.mxu0 0.0
    %661 = vmatprep.subr.mxu0 0.0
    %662 = vmatpush1.msra.mxu0 0.0
    %663 = vmatprep.subr.mxu0 0.0
    %664 = vmatpush1.msra.mxu0 0.0
    %665 = vmatprep.subr.mxu0 0.0
    %666 = vmatpush1.msra.mxu0 0.0
    %667 = vmatprep.subr.mxu0 0.0
    %668 = vmatpush1.msra.mxu0 0.0
    %669 = vmatprep.subr.mxu0 0.0
    %670 = vmatpush1.msra.mxu0 0.0
    %671 = vmatprep.subr.mxu0 0.0
    %672 = vmatpush1.msra.mxu0 0.0
    %673 = vmatprep.subr.mxu0 0.0
    %674 = vmatpush1.msra.mxu0 0.0
    %675 = vmatprep.subr.mxu0 0.0
    %676 = vmatpush1.msra.mxu0 0.0
    %677 = vmatprep.subr.mxu0 0.0
    %678 = vmatpush1.msra.mxu0 0.0
    %679 = vmatprep.subr.mxu0 0.0
    %680 = vmatpush1.msra.mxu0 0.0
    %681 = vmatprep.subr.mxu0 0.0
    %682 = vmatpush1.msra.mxu0 0.0
    %683 = vmatprep.subr.mxu0 0.0
    %684 = vmatpush1.msra.mxu0 0.0
    %685 = vmatprep.mubr.f32.mxu0 0.0
    %686 = vmatmul.mubr.f32.gmra.mrb[0].mxu0 %v602
    %v687 = vpop.f32.mrb[0].mxu0
    %v688 = vadd.f32 0.0, %v687
    %v689 = vpop.f32.mrb[0].mxu0
    %690 = vdwg.mxu0
    %v691 = vadd.f32 %v603, %v688
    %692 = vst [vmem:[#allocation12] sm:$0xff] %v691
    %693 = vst [vmem:[#allocation3] sm:$0xff] %v602
    %v694 = vld [vmem:[#allocation12] sm:$0xff]
    %v695 = vld [vmem:[%s4] sm:$0x1]
    %v697 = vlaneseq
    %v698 = vshrl.u32 %v697, 7
    %v699 = vsub.s32 0, %v698
    %v700 = vrot.slane %v695, %v699
    %v702 = vadd.f32 %v694, %v700
    %703 = vst [vmem:[#allocation12] sm:$0xff] %v702
    // Predicated region
    $region38: #{tpu_custom_call.1} parent=1 // pred_check
      _
    $region39: #{tpu_custom_call.1} parent=1 // pred_check_branch
      %705 = sbr.rel (0) target = $region41
    $region40: #{tpu_custom_call.1} parent=1 // pred_region
      %s707 = ssub.s32 128, 128
      %708 = vsyncadd [#allocation6], %s707
      %s710 = sshll.u32 [#allocation12], 4
      %s711 = int_to_ptr.vmem [resolvable:$true] %s710
      %713 = dma.vmem_to_hbm [thread:$0]  %s711, 128, %s5, [#allocation6]
    $region41: #{tpu_custom_call.1} parent=1 // pred_fallthru
      _
    // Predicated region
    $region42: #{tpu_custom_call.1} parent=1 // pred_check
      _
    $region43: #{tpu_custom_call.1} parent=1 // pred_check_branch
      %715 = sbr.rel (0) target = $region45
    $region44: #{tpu_custom_call.1} parent=1 // pred_region
      %716 = dma.done [#allocation6], 128
    $region45: #{tpu_custom_call.1} parent=1 // pred_fallthru
      _
    %717 = vsyncpa [#allocation5], 1
    %718 = vsyncpa [#allocation8], 1
    %719 = vsyncpa [#allocation11], 1
    %720 = vsyncpa [#allocation6], 1

// kernel: tpu_custom_call.1
$region0: #{tpu_custom_call.1}
  #allocation0 [shape = 'u32[]', space=smem, size = 0x4, offset = 0x4, fixed_abs, tag = 'smem constant byte address 0x4 - core index']
  #allocation1 [shape = 'u32[144,128]{1,0:T(1,128)}', space=vmem, size = 0x12000, scoped, tag = 'internal scratch']
  #allocation2 [shape = 'f32[8,384]{1,0:T(8,128)}', space=vmem, size = 0x3000, scoped, tag = 'scratch operand']
  #allocation3 [shape = 'f32[8,128]{1,0:T(8,128)}', space=vmem, size = 0x1000, scoped, tag = 'scratch operand']
  %s0 = inlined_call_operand.hbm [shape: f32[8,40], index: 0, kind: input, shape index: {}]
  %s1 = inlined_call_operand.hbm [shape: f32[40,384], index: 1, kind: input, shape index: {}]
  %s2 = inlined_call_operand.hbm [shape: f32[3,128,128], index: 2, kind: input, shape index: {}]
  %s3 = inlined_call_operand.hbm [shape: f32[3,128,128], index: 3, kind: input, shape index: {}]
  %s4 = inlined_call_operand.vmem [shape: f32[1,128], index: 4, kind: input, shape index: {}]
  %s5 = inlined_call_operand.hbm [shape: f32[8,128], index: 5, kind: output, shape index: {}]
  %s6 = sld [smem:[#allocation0]]
  $region46: #{tpu_custom_call.1} parent=0
    _
  %s8 = ssub.s32 1, %s6
  %s9 = scalar_select 0, %s8, %s6
  $region1: #{tpu_custom_call.1} parent=0
    #allocation4 [shape = 'u8[4096]{0}', space=vmem, size = 0x1000, scoped, tag = 'input window, operand 0, single buffered']
    #allocation5 [shape = 's32[1]{0}', space=sflag, size = 0x4, scoped, tag = 'scoped memory for tpu_custom_call.1']
    #allocation6 [shape = 's32[1]{0}', space=sflag, size = 0x4, scoped, tag = 'scoped memory for tpu_custom_call.1']
    #allocation7 [shape = 'u8[61440]{0}', space=vmem, size = 0xf000, scoped, tag = 'input window, operand 1, single buffered']
    #allocation8 [shape = 's32[1]{0}', space=sflag, size = 0x4, scoped, tag = 'scoped memory for tpu_custom_call.1']
    #allocation9 [shape = 'u8[196608]{0}', space=vmem, size = 0x30000, scoped, tag = 'input window, operand 2, single buffered']
    #allocation10 [shape = 'u8[196608]{0}', space=vmem, size = 0x30000, scoped, tag = 'input window, operand 3, single buffered']
    #allocation11 [shape = 's32[1]{0}', space=sflag, size = 0x4, scoped, tag = 'scoped memory for tpu_custom_call.1']
    #allocation12 [shape = 'u8[4096]{0}', space=vmem, size = 0x1000, scoped, tag = 'output window, operand 0, single buffered']
    %10 = vsyncpa [#allocation5], 0
    %11 = vsyncpa [#allocation8], 0
    %12 = vsyncpa [#allocation11], 0
    %13 = vsyncpa [#allocation6], 0
    // Predicated region
    $region2: #{tpu_custom_call.1} parent=1 // pred_check
      _
    $region3: #{tpu_custom_call.1} parent=1 // pred_check_branch
      %15 = sbr.rel (0) target = $region5
    $region4: #{tpu_custom_call.1} parent=1 // pred_region
      %s17 = ssub.s32 128, 128
      %18 = vsyncadd [#allocation5], %s17
      %s20 = sshll.u32 [#allocation4], 4
      %s21 = int_to_ptr.vmem [resolvable:$true] %s20
      %23 = dma.hbm_to_vmem [thread:$0]  %s0, 128, %s21, [#allocation5]
    $region5: #{tpu_custom_call.1} parent=1 // pred_fallthru
      _
    // Predicated region
    $region6: #{tpu_custom_call.1} parent=1 // pred_check
      _
    $region7: #{tpu_custom_call.1} parent=1 // pred_check_branch
      %25 = sbr.rel (0) target = $region9
    $region8: #{tpu_custom_call.1} parent=1 // pred_region
      %s27 = ssub.s32 1920, 1920
      %28 = vsyncadd [#allocation8], %s27
      %s29 = sshll.u32 [#allocation7], 4
      %s30 = int_to_ptr.vmem [resolvable:$true] %s29
      %35 = dma.hbm_to_vmem [thread:$0]  %s1, 1920, %s30, [#allocation8], 384, 384, 24
    $region9: #{tpu_custom_call.1} parent=1 // pred_fallthru
      _
    // Predicated region
    $region10: #{tpu_custom_call.1} parent=1 // pred_check
      _
    $region11: #{tpu_custom_call.1} parent=1 // pred_check_branch
      %37 = sbr.rel (0) target = $region13
    $region12: #{tpu_custom_call.1} parent=1 // pred_region
      %s39 = ssub.s32 6144, 6144
      %40 = vsyncadd [#allocation8], %s39
      %s41 = sshll.u32 [#allocation9], 4
      %s42 = int_to_ptr.vmem [resolvable:$true] %s41
      %47 = dma.hbm_to_vmem [thread:$0]  %s2, 6144, %s42, [#allocation8], 128, 128, 8
    $region13: #{tpu_custom_call.1} parent=1 // pred_fallthru
      _
    // Predicated region
    $region14: #{tpu_custom_call.1} parent=1 // pred_check
      _
    $region15: #{tpu_custom_call.1} parent=1 // pred_check_branch
      %49 = sbr.rel (0) target = $region17
    $region16: #{tpu_custom_call.1} parent=1 // pred_region
      %s51 = ssub.s32 6144, 6144
      %52 = vsyncadd [#allocation11], %s51
      %s53 = sshll.u32 [#allocation10], 4
      %s54 = int_to_ptr.vmem [resolvable:$true] %s53
      %59 = dma.hbm_to_vmem [thread:$0]  %s3, 6144, %s54, [#allocation11], 128, 128, 8
    $region17: #{tpu_custom_call.1} parent=1 // pred_fallthru
      _
    // Predicated region
    $region18: #{tpu_custom_call.1} parent=1 // pred_check
      _
    $region19: #{tpu_custom_call.1} parent=1 // pred_check_branch
      %61 = sbr.rel (0) target = $region21
    $region20: #{tpu_custom_call.1} parent=1 // pred_region
      _
    $region21: #{tpu_custom_call.1} parent=1 // pred_fallthru
      _
    // Predicated region
    $region22: #{tpu_custom_call.1} parent=1 // pred_check
      _
    $region23: #{tpu_custom_call.1} parent=1 // pred_check_branch
      %63 = sbr.rel (0) target = $region25
    $region24: #{tpu_custom_call.1} parent=1 // pred_region
      %64 = dma.done [#allocation5], 128
    $region25: #{tpu_custom_call.1} parent=1 // pred_fallthru
      _
    // Predicated region
    $region26: #{tpu_custom_call.1} parent=1 // pred_check
      _
    $region27: #{tpu_custom_call.1} parent=1 // pred_check_branch
      %66 = sbr.rel (0) target = $region29
    $region28: #{tpu_custom_call.1} parent=1 // pred_region
      %67 = dma.done [#allocation8], 1920
    $region29: #{tpu_custom_call.1} parent=1 // pred_fallthru
      _
    // Predicated region
    $region30: #{tpu_custom_call.1} parent=1 // pred_check
      _
    $region31: #{tpu_custom_call.1} parent=1 // pred_check_branch
      %69 = sbr.rel (0) target = $region33
    $region32: #{tpu_custom_call.1} parent=1 // pred_region
      %70 = dma.done [#allocation8], 6144
    $region33: #{tpu_custom_call.1} parent=1 // pred_fallthru
      _
    // Predicated region
    $region34: #{tpu_custom_call.1} parent=1 // pred_check
      _
    $region35: #{tpu_custom_call.1} parent=1 // pred_check_branch
      %72 = sbr.rel (0) target = $region37
    $region36: #{tpu_custom_call.1} parent=1 // pred_region
      %73 = dma.done [#allocation11], 6144
    $region37: #{tpu_custom_call.1} parent=1 // pred_fallthru
      _
    %v74 = vld [vmem:[#allocation4] sm:$0xff]
    %v75 = vld [vmem:[#allocation7] sm:$0xff]
    %v76 = vld [vmem:[#allocation7 + $0x8] sm:$0xff]
    %v77 = vld [vmem:[#allocation7 + $0x10] sm:$0xff]
    %v78 = vld [vmem:[#allocation7 + $0x18] sm:$0xff]
    %v79 = vld [vmem:[#allocation7 + $0x20] sm:$0xff]
    %v80 = vld [vmem:[#allocation7 + $0x28] sm:$0xff]
    %v81 = vld [vmem:[#allocation7 + $0x30] sm:$0xff]
    %v82 = vld [vmem:[#allocation7 + $0x38] sm:$0xff]
    %v83 = vld [vmem:[#allocation7 + $0x40] sm:$0xff]
    %v84 = vld [vmem:[#allocation7 + $0x48] sm:$0xff]
    %v85 = vld [vmem:[#allocation7 + $0x50] sm:$0xff]
    %v86 = vld [vmem:[#allocation7 + $0x58] sm:$0xff]
    %v87 = vld [vmem:[#allocation7 + $0x60] sm:$0xff]
    %v88 = vld [vmem:[#allocation7 + $0x68] sm:$0xff]
    %v89 = vld [vmem:[#allocation7 + $0x70] sm:$0xff]
    %vm90 = vcmask 326656
    %v92 = vsel %vm90, %v74, 0
    %94 = vmatprep.subr.mxu0 %v76
    %95 = vmatpush1.msra.mxu0 %v75
    %96 = vmatprep.subr.mxu0 %v79
    %97 = vmatpush1.msra.mxu0 %v78
    %98 = vmatprep.subr.mxu0 %v82
    %99 = vmatpush1.msra.mxu0 %v81
    %100 = vmatprep.subr.mxu0 %v85
    %101 = vmatpush1.msra.mxu0 %v84
    %102 = vmatprep.subr.mxu0 %v88
    %103 = vmatpush1.msra.mxu0 %v87
    %104 = vmatprep.subr.mxu0 0.0
    %105 = vmatpush1.msra.mxu0 0.0
    %106 = vmatprep.subr.mxu0 0.0
    %107 = vmatpush1.msra.mxu0 0.0
    %108 = vmatprep.subr.mxu0 0.0
    %109 = vmatpush1.msra.mxu0 0.0
    %110 = vmatprep.subr.mxu0 0.0
    %111 = vmatpush1.msra.mxu0 0.0
    %112 = vmatprep.subr.mxu0 0.0
    %113 = vmatpush1.msra.mxu0 0.0
    %114 = vmatprep.subr.mxu0 0.0
    %115 = vmatpush1.msra.mxu0 0.0
    %116 = vmatprep.subr.mxu0 0.0
    %117 = vmatpush1.msra.mxu0 0.0
    %118 = vmatprep.subr.mxu0 0.0
    %119 = vmatpush1.msra.mxu0 0.0
    %120 = vmatprep.subr.mxu0 0.0
    %121 = vmatpush1.msra.mxu0 0.0
    %122 = vmatprep.subr.mxu0 0.0
    %123 = vmatpush1.msra.mxu0 0.0
    %124 = vmatprep.subr.mxu0 0.0
    %125 = vmatpush1.msra.mxu0 0.0
    %126 = vmatprep.subr.mxu0 0.0
    %127 = vmatpush1.msra.mxu0 0.0
    %128 = vmatprep.subr.mxu0 0.0
    %129 = vmatpush1.msra.mxu0 0.0
    %130 = vmatprep.subr.mxu0 0.0
    %131 = vmatpush1.msra.mxu0 0.0
    %132 = vmatprep.subr.mxu0 0.0
    %133 = vmatpush1.msra.mxu0 0.0
    %134 = vmatprep.subr.mxu0 0.0
    %135 = vmatpush1.msra.mxu0 0.0
    %136 = vmatprep.subr.mxu0 0.0
    %137 = vmatpush1.msra.mxu0 0.0
    %138 = vmatprep.subr.mxu0 0.0
    %139 = vmatpush1.msra.mxu0 0.0
    %140 = vmatprep.subr.mxu0 0.0
    %141 = vmatpush1.msra.mxu0 0.0
    %142 = vmatprep.subr.mxu0 0.0
    %143 = vmatpush1.msra.mxu0 0.0
    %144 = vmatprep.subr.mxu0 0.0
    %145 = vmatpush1.msra.mxu0 0.0
    %146 = vmatprep.subr.mxu0 0.0
    %147 = vmatpush1.msra.mxu0 0.0
    %148 = vmatprep.subr.mxu0 0.0
    %149 = vmatpush1.msra.mxu0 0.0
    %150 = vmatprep.subr.mxu0 0.0
    %151 = vmatpush1.msra.mxu0 0.0
    %152 = vmatprep.subr.mxu0 0.0
    %153 = vmatpush1.msra.mxu0 0.0
    %154 = vmatprep.subr.mxu0 0.0
    %155 = vmatpush1.msra.mxu0 0.0
    %156 = vmatprep.subr.mxu0 0.0
    %157 = vmatpush1.msra.mxu0 0.0
    %158 = vmatprep.mubr.f32.mxu0 0.0
    %159 = vmatmul.mubr.f32.gmra.mrb[0].mxu0 %v92
    %v160 = vpop.f32.mrb[0].mxu0
    %v161 = vadd.f32 0.0, %v160
    %v162 = vpop.f32.mrb[0].mxu0
    %v163 = vadd.f32 0.0, %v162
    %164 = vdwg.mxu0
    %165 = vmatprep.subr.mxu0 0.0
    %166 = vmatpush1.msra.mxu0 %v77
    %167 = vmatprep.subr.mxu0 0.0
    %168 = vmatpush1.msra.mxu0 %v80
    %169 = vmatprep.subr.mxu0 0.0
    %170 = vmatpush1.msra.mxu0 %v83
    %171 = vmatprep.subr.mxu0 0.0
    %172 = vmatpush1.msra.mxu0 %v86
    %173 = vmatprep.subr.mxu0 0.0
    %174 = vmatpush1.msra.mxu0 %v89
    %175 = vmatprep.subr.mxu0 0.0
    %176 = vmatpush1.msra.mxu0 0.0
    %177 = vmatprep.subr.mxu0 0.0
    %178 = vmatpush1.msra.mxu0 0.0
    %179 = vmatprep.subr.mxu0 0.0
    %180 = vmatpush1.msra.mxu0 0.0
    %181 = vmatprep.subr.mxu0 0.0
    %182 = vmatpush1.msra.mxu0 0.0
    %183 = vmatprep.subr.mxu0 0.0
    %184 = vmatpush1.msra.mxu0 0.0
    %185 = vmatprep.subr.mxu0 0.0
    %186 = vmatpush1.msra.mxu0 0.0
    %187 = vmatprep.subr.mxu0 0.0
    %188 = vmatpush1.msra.mxu0 0.0
    %189 = vmatprep.subr.mxu0 0.0
    %190 = vmatpush1.msra.mxu0 0.0
    %191 = vmatprep.subr.mxu0 0.0
    %192 = vmatpush1.msra.mxu0 0.0
    %193 = vmatprep.subr.mxu0 0.0
    %194 = vmatpush1.msra.mxu0 0.0
    %195 = vmatprep.subr.mxu0 0.0
    %196 = vmatpush1.msra.mxu0 0.0
    %197 = vmatprep.subr.mxu0 0.0
    %198 = vmatpush1.msra.mxu0 0.0
    %199 = vmatprep.subr.mxu0 0.0
    %200 = vmatpush1.msra.mxu0 0.0
    %201 = vmatprep.subr.mxu0 0.0
    %202 = vmatpush1.msra.mxu0 0.0
    %203 = vmatprep.subr.mxu0 0.0
    %204 = vmatpush1.msra.mxu0 0.0
    %205 = vmatprep.subr.mxu0 0.0
    %206 = vmatpush1.msra.mxu0 0.0
    %207 = vmatprep.subr.mxu0 0.0
    %208 = vmatpush1.msra.mxu0 0.0
    %209 = vmatprep.subr.mxu0 0.0
    %210 = vmatpush1.msra.mxu0 0.0
    %211 = vmatprep.subr.mxu0 0.0
    %212 = vmatpush1.msra.mxu0 0.0
    %213 = vmatprep.subr.mxu0 0.0
    %214 = vmatpush1.msra.mxu0 0.0
    %215 = vmatprep.subr.mxu0 0.0
    %216 = vmatpush1.msra.mxu0 0.0
    %217 = vmatprep.subr.mxu0 0.0
    %218 = vmatpush1.msra.mxu0 0.0
    %219 = vmatprep.subr.mxu0 0.0
    %220 = vmatpush1.msra.mxu0 0.0
    %221 = vmatprep.subr.mxu0 0.0
    %222 = vmatpush1.msra.mxu0 0.0
    %223 = vmatprep.subr.mxu0 0.0
    %224 = vmatpush1.msra.mxu0 0.0
    %225 = vmatprep.subr.mxu0 0.0
    %226 = vmatpush1.msra.mxu0 0.0
    %227 = vmatprep.subr.mxu0 0.0
    %228 = vmatpush1.msra.mxu0 0.0
    %229 = vmatprep.mubr.f32.mxu0 0.0
    %230 = vmatmul.mubr.f32.gmra.mrb[0].mxu0 %v92
    %v231 = vpop.f32.mrb[0].mxu0
    %v232 = vadd.f32 0.0, %v231
    %v233 = vpop.f32.mrb[0].mxu0
    %234 = vdwg.mxu0
    %235 = vst [vmem:[#allocation2] sm:$0xff] %v161
    %236 = vst [vmem:[#allocation2 + $0x8] sm:$0xff] %v163
    %237 = vst [vmem:[#allocation2 + $0x10] sm:$0xff] %v232
    %v238 = vld [vmem:[#allocation2] sm:$0xff]
    %v239 = vmax.f32 %v238, 0.0
    %v240 = vld [vmem:[#allocation10] sm:$0xff]
    %v241 = vld [vmem:[#allocation10 + $0x8] sm:$0xff]
    %v242 = vld [vmem:[#allocation10 + $0x10] sm:$0xff]
    %v243 = vld [vmem:[#allocation10 + $0x18] sm:$0xff]
    %v244 = vld [vmem:[#allocation10 + $0x20] sm:$0xff]
    %v245 = vld [vmem:[#allocation10 + $0x28] sm:$0xff]
    %v246 = vld [vmem:[#allocation10 + $0x30] sm:$0xff]
    %v247 = vld [vmem:[#allocation10 + $0x38] sm:$0xff]
    %v248 = vld [vmem:[#allocation10 + $0x40] sm:$0xff]
    %v249 = vld [vmem:[#allocation10 + $0x48] sm:$0xff]
    %v250 = vld [vmem:[#allocation10 + $0x50] sm:$0xff]
    %v251 = vld [vmem:[#allocation10 + $0x58] sm:$0xff]
    %v252 = vld [vmem:[#allocation10 + $0x60] sm:$0xff]
    %v253 = vld [vmem:[#allocation10 + $0x68] sm:$0xff]
    %v254 = vld [vmem:[#allocation10 + $0x70] sm:$0xff]
    %v255 = vld [vmem:[#allocation10 + $0x78] sm:$0xff]
    %256 = vmatprep.subr.mxu0 0.0
    %257 = vmatpush1.msra.mxu0 %v240
    %258 = vmatprep.subr.mxu0 0.0
    %259 = vmatpush1.msra.mxu0 %v241
    %260 = vmatprep.subr.mxu0 0.0
    %261 = vmatpush1.msra.mxu0 %v242
    %262 = vmatprep.subr.mxu0 0.0
    %263 = vmatpush1.msra.mxu0 %v243
    %264 = vmatprep.subr.mxu0 0.0
    %265 = vmatpush1.msra.mxu0 %v244
    %266 = vmatprep.subr.mxu0 0.0
    %267 = vmatpush1.msra.mxu0 %v245
    %268 = vmatprep.subr.mxu0 0.0
    %269 = vmatpush1.msra.mxu0 %v246
    %270 = vmatprep.subr.mxu0 0.0
    %271 = vmatpush1.msra.mxu0 %v247
    %272 = vmatprep.subr.mxu0 0.0
    %273 = vmatpush1.msra.mxu0 %v248
    %274 = vmatprep.subr.mxu0 0.0
    %275 = vmatpush1.msra.mxu0 %v249
    %276 = vmatprep.subr.mxu0 0.0
    %277 = vmatpush1.msra.mxu0 %v250
    %278 = vmatprep.subr.mxu0 0.0
    %279 = vmatpush1.msra.mxu0 %v251
    %280 = vmatprep.subr.mxu0 0.0
    %281 = vmatpush1.msra.mxu0 %v252
    %282 = vmatprep.subr.mxu0 0.0
    %283 = vmatpush1.msra.mxu0 %v253
    %284 = vmatprep.subr.mxu0 0.0
    %285 = vmatpush1.msra.mxu0 %v254
    %286 = vmatprep.subr.mxu0 0.0
    %287 = vmatpush1.msra.mxu0 %v255
    %288 = vmatprep.subr.mxu0 0.0
    %289 = vmatpush1.msra.mxu0 0.0
    %290 = vmatprep.subr.mxu0 0.0
    %291 = vmatpush1.msra.mxu0 0.0
    %292 = vmatprep.subr.mxu0 0.0
    %293 = vmatpush1.msra.mxu0 0.0
    %294 = vmatprep.subr.mxu0 0.0
    %295 = vmatpush1.msra.mxu0 0.0
    %296 = vmatprep.subr.mxu0 0.0
    %297 = vmatpush1.msra.mxu0 0.0
    %298 = vmatprep.subr.mxu0 0.0
    %299 = vmatpush1.msra.mxu0 0.0
    %300 = vmatprep.subr.mxu0 0.0
    %301 = vmatpush1.msra.mxu0 0.0
    %302 = vmatprep.subr.mxu0 0.0
    %303 = vmatpush1.msra.mxu0 0.0
    %304 = vmatprep.subr.mxu0 0.0
    %305 = vmatpush1.msra.mxu0 0.0
    %306 = vmatprep.subr.mxu0 0.0
    %307 = vmatpush1.msra.mxu0 0.0
    %308 = vmatprep.subr.mxu0 0.0
    %309 = vmatpush1.msra.mxu0 0.0
    %310 = vmatprep.subr.mxu0 0.0
    %311 = vmatpush1.msra.mxu0 0.0
    %312 = vmatprep.subr.mxu0 0.0
    %313 = vmatpush1.msra.mxu0 0.0
    %314 = vmatprep.subr.mxu0 0.0
    %315 = vmatpush1.msra.mxu0 0.0
    %316 = vmatprep.subr.mxu0 0.0
    %317 = vmatpush1.msra.mxu0 0.0
    %318 = vmatprep.subr.mxu0 0.0
    %319 = vmatpush1.msra.mxu0 0.0
    %320 = vmatprep.mubr.f32.mxu0 0.0
    %321 = vmatmul.mubr.f32.gmra.mrb[0].mxu0 %v239
    %v322 = vpop.f32.mrb[0].mxu0
    %v323 = vadd.f32 0.0, %v322
    %v324 = vpop.f32.mrb[0].mxu0
    %325 = vdwg.mxu0
    %326 = vst [vmem:[#allocation12] sm:$0xff] %v323
    %327 = vst [vmem:[#allocation3] sm:$0xff] %v239
    %s328 = scalar_lea.vmem [#allocation2], 8
    %v329 = vld [vmem:[%s328] sm:$0xff]
    %v330 = vld [vmem:[#allocation3] sm:$0xff]
    %s331 = scalar_lea.vmem [#allocation9], 128
    %v332 = vld [vmem:[%s331] sm:$0xff]
    %v333 = vld [vmem:[%s331 + $0x8] sm:$0xff]
    %v334 = vld [vmem:[%s331 + $0x10] sm:$0xff]
    %v335 = vld [vmem:[%s331 + $0x18] sm:$0xff]
    %v336 = vld [vmem:[%s331 + $0x20] sm:$0xff]
    %v337 = vld [vmem:[%s331 + $0x28] sm:$0xff]
    %v338 = vld [vmem:[%s331 + $0x30] sm:$0xff]
    %v339 = vld [vmem:[%s331 + $0x38] sm:$0xff]
    %v340 = vld [vmem:[%s331 + $0x40] sm:$0xff]
    %v341 = vld [vmem:[%s331 + $0x48] sm:$0xff]
    %v342 = vld [vmem:[%s331 + $0x50] sm:$0xff]
    %v343 = vld [vmem:[%s331 + $0x58] sm:$0xff]
    %v344 = vld [vmem:[%s331 + $0x60] sm:$0xff]
    %v345 = vld [vmem:[%s331 + $0x68] sm:$0xff]
    %v346 = vld [vmem:[%s331 + $0x70] sm:$0xff]
    %v347 = vld [vmem:[%s331 + $0x78] sm:$0xff]
    %348 = vmatprep.subr.mxu0 0.0
    %349 = vmatpush1.msra.mxu0 %v332
    %350 = vmatprep.subr.mxu0 0.0
    %351 = vmatpush1.msra.mxu0 %v333
    %352 = vmatprep.subr.mxu0 0.0
    %353 = vmatpush1.msra.mxu0 %v334
    %354 = vmatprep.subr.mxu0 0.0
    %355 = vmatpush1.msra.mxu0 %v335
    %356 = vmatprep.subr.mxu0 0.0
    %357 = vmatpush1.msra.mxu0 %v336
    %358 = vmatprep.subr.mxu0 0.0
    %359 = vmatpush1.msra.mxu0 %v337
    %360 = vmatprep.subr.mxu0 0.0
    %361 = vmatpush1.msra.mxu0 %v338
    %362 = vmatprep.subr.mxu0 0.0
    %363 = vmatpush1.msra.mxu0 %v339
    %364 = vmatprep.subr.mxu0 0.0
    %365 = vmatpush1.msra.mxu0 %v340
    %366 = vmatprep.subr.mxu0 0.0
    %367 = vmatpush1.msra.mxu0 %v341
    %368 = vmatprep.subr.mxu0 0.0
    %369 = vmatpush1.msra.mxu0 %v342
    %370 = vmatprep.subr.mxu0 0.0
    %371 = vmatpush1.msra.mxu0 %v343
    %372 = vmatprep.subr.mxu0 0.0
    %373 = vmatpush1.msra.mxu0 %v344
    %374 = vmatprep.subr.mxu0 0.0
    %375 = vmatpush1.msra.mxu0 %v345
    %376 = vmatprep.subr.mxu0 0.0
    %377 = vmatpush1.msra.mxu0 %v346
    %378 = vmatprep.subr.mxu0 0.0
    %379 = vmatpush1.msra.mxu0 %v347
    %380 = vmatprep.subr.mxu0 0.0
    %381 = vmatpush1.msra.mxu0 0.0
    %382 = vmatprep.subr.mxu0 0.0
    %383 = vmatpush1.msra.mxu0 0.0
    %384 = vmatprep.subr.mxu0 0.0
    %385 = vmatpush1.msra.mxu0 0.0
    %386 = vmatprep.subr.mxu0 0.0
    %387 = vmatpush1.msra.mxu0 0.0
    %388 = vmatprep.subr.mxu0 0.0
    %389 = vmatpush1.msra.mxu0 0.0
    %390 = vmatprep.subr.mxu0 0.0
    %391 = vmatpush1.msra.mxu0 0.0
    %392 = vmatprep.subr.mxu0 0.0
    %393 = vmatpush1.msra.mxu0 0.0
    %394 = vmatprep.subr.mxu0 0.0
    %395 = vmatpush1.msra.mxu0 0.0
    %396 = vmatprep.subr.mxu0 0.0
    %397 = vmatpush1.msra.mxu0 0.0
    %398 = vmatprep.subr.mxu0 0.0
    %399 = vmatpush1.msra.mxu0 0.0
    %400 = vmatprep.subr.mxu0 0.0
    %401 = vmatpush1.msra.mxu0 0.0
    %402 = vmatprep.subr.mxu0 0.0
    %403 = vmatpush1.msra.mxu0 0.0
    %404 = vmatprep.subr.mxu0 0.0
    %405 = vmatpush1.msra.mxu0 0.0
    %406 = vmatprep.subr.mxu0 0.0
    %407 = vmatpush1.msra.mxu0 0.0
    %408 = vmatprep.subr.mxu0 0.0
    %409 = vmatpush1.msra.mxu0 0.0
    %410 = vmatprep.subr.mxu0 0.0
    %411 = vmatpush1.msra.mxu0 0.0
    %412 = vmatprep.mubr.f32.mxu0 0.0
    %413 = vmatmul.mubr.f32.gmra.mrb[0].mxu0 %v330
    %v414 = vpop.f32.mrb[0].mxu0
    %v415 = vadd.f32 0.0, %v414
    %v416 = vpop.f32.mrb[0].mxu0
    %417 = vdwg.mxu0
    %v418 = vadd.f32 %v329, %v415
    %v419 = vmax.f32 %v418, 0.0
    %v420 = vld [vmem:[#allocation12] sm:$0xff]
    %s421 = scalar_lea.vmem [#allocation10], 128
    %v422 = vld [vmem:[%s421] sm:$0xff]
    %v423 = vld [vmem:[%s421 + $0x8] sm:$0xff]
    %v424 = vld [vmem:[%s421 + $0x10] sm:$0xff]
    %v425 = vld [vmem:[%s421 + $0x18] sm:$0xff]
    %v426 = vld [vmem:[%s421 + $0x20] sm:$0xff]
    %v427 = vld [vmem:[%s421 + $0x28] sm:$0xff]
    %v428 = vld [vmem:[%s421 + $0x30] sm:$0xff]
    %v429 = vld [vmem:[%s421 + $0x38] sm:$0xff]
    %v430 = vld [vmem:[%s421 + $0x40] sm:$0xff]
    %v431 = vld [vmem:[%s421 + $0x48] sm:$0xff]
    %v432 = vld [vmem:[%s421 + $0x50] sm:$0xff]
    %v433 = vld [vmem:[%s421 + $0x58] sm:$0xff]
    %v434 = vld [vmem:[%s421 + $0x60] sm:$0xff]
    %v435 = vld [vmem:[%s421 + $0x68] sm:$0xff]
    %v436 = vld [vmem:[%s421 + $0x70] sm:$0xff]
    %v437 = vld [vmem:[%s421 + $0x78] sm:$0xff]
    %438 = vmatprep.subr.mxu0 0.0
    %439 = vmatpush1.msra.mxu0 %v422
    %440 = vmatprep.subr.mxu0 0.0
    %441 = vmatpush1.msra.mxu0 %v423
    %442 = vmatprep.subr.mxu0 0.0
    %443 = vmatpush1.msra.mxu0 %v424
    %444 = vmatprep.subr.mxu0 0.0
    %445 = vmatpush1.msra.mxu0 %v425
    %446 = vmatprep.subr.mxu0 0.0
    %447 = vmatpush1.msra.mxu0 %v426
    %448 = vmatprep.subr.mxu0 0.0
    %449 = vmatpush1.msra.mxu0 %v427
    %450 = vmatprep.subr.mxu0 0.0
    %451 = vmatpush1.msra.mxu0 %v428
    %452 = vmatprep.subr.mxu0 0.0
    %453 = vmatpush1.msra.mxu0 %v429
    %454 = vmatprep.subr.mxu0 0.0
    %455 = vmatpush1.msra.mxu0 %v430
    %456 = vmatprep.subr.mxu0 0.0
    %457 = vmatpush1.msra.mxu0 %v431
    %458 = vmatprep.subr.mxu0 0.0
    %459 = vmatpush1.msra.mxu0 %v432
    %460 = vmatprep.subr.mxu0 0.0
    %461 = vmatpush1.msra.mxu0 %v433
    %462 = vmatprep.subr.mxu0 0.0
    %463 = vmatpush1.msra.mxu0 %v434
    %464 = vmatprep.subr.mxu0 0.0
    %465 = vmatpush1.msra.mxu0 %v435
    %466 = vmatprep.subr.mxu0 0.0
    %467 = vmatpush1.msra.mxu0 %v436
    %468 = vmatprep.subr.mxu0 0.0
    %469 = vmatpush1.msra.mxu0 %v437
    %470 = vmatprep.subr.mxu0 0.0
    %471 = vmatpush1.msra.mxu0 0.0
    %472 = vmatprep.subr.mxu0 0.0
    %473 = vmatpush1.msra.mxu0 0.0
    %474 = vmatprep.subr.mxu0 0.0
    %475 = vmatpush1.msra.mxu0 0.0
    %476 = vmatprep.subr.mxu0 0.0
    %477 = vmatpush1.msra.mxu0 0.0
    %478 = vmatprep.subr.mxu0 0.0
    %479 = vmatpush1.msra.mxu0 0.0
    %480 = vmatprep.subr.mxu0 0.0
    %481 = vmatpush1.msra.mxu0 0.0
    %482 = vmatprep.subr.mxu0 0.0
    %483 = vmatpush1.msra.mxu0 0.0
    %484 = vmatprep.subr.mxu0 0.0
    %485 = vmatpush1.msra.mxu0 0.0
    %486 = vmatprep.subr.mxu0 0.0
    %487 = vmatpush1.msra.mxu0 0.0
    %488 = vmatprep.subr.mxu0 0.0
    %489 = vmatpush1.msra.mxu0 0.0
    %490 = vmatprep.subr.mxu0 0.0
    %491 = vmatpush1.msra.mxu0 0.0
    %492 = vmatprep.subr.mxu0 0.0
    %493 = vmatpush1.msra.mxu0 0.0
    %494 = vmatprep.subr.mxu0 0.0
    %495 = vmatpush1.msra.mxu0 0.0
    %496 = vmatprep.subr.mxu0 0.0
    %497 = vmatpush1.msra.mxu0 0.0
    %498 = vmatprep.subr.mxu0 0.0
    %499 = vmatpush1.msra.mxu0 0.0
    %500 = vmatprep.subr.mxu0 0.0
    %501 = vmatpush1.msra.mxu0 0.0
    %502 = vmatprep.mubr.f32.mxu0 0.0
    %503 = vmatmul.mubr.f32.gmra.mrb[0].mxu0 %v419
    %v504 = vpop.f32.mrb[0].mxu0
    %v505 = vadd.f32 0.0, %v504
    %v506 = vpop.f32.mrb[0].mxu0
    %507 = vdwg.mxu0
    %v508 = vadd.f32 %v420, %v505
    %509 = vst [vmem:[#allocation12] sm:$0xff] %v508
    %510 = vst [vmem:[#allocation3] sm:$0xff] %v419
    %s511 = scalar_lea.vmem [#allocation2], 16
    %v512 = vld [vmem:[%s511] sm:$0xff]
    %v513 = vld [vmem:[#allocation3] sm:$0xff]
    %s514 = scalar_lea.vmem [#allocation9], 256
    %v515 = vld [vmem:[%s514] sm:$0xff]
    %v516 = vld [vmem:[%s514 + $0x8] sm:$0xff]
    %v517 = vld [vmem:[%s514 + $0x10] sm:$0xff]
    %v518 = vld [vmem:[%s514 + $0x18] sm:$0xff]
    %v519 = vld [vmem:[%s514 + $0x20] sm:$0xff]
    %v520 = vld [vmem:[%s514 + $0x28] sm:$0xff]
    %v521 = vld [vmem:[%s514 + $0x30] sm:$0xff]
    %v522 = vld [vmem:[%s514 + $0x38] sm:$0xff]
    %v523 = vld [vmem:[%s514 + $0x40] sm:$0xff]
    %v524 = vld [vmem:[%s514 + $0x48] sm:$0xff]
    %v525 = vld [vmem:[%s514 + $0x50] sm:$0xff]
    %v526 = vld [vmem:[%s514 + $0x58] sm:$0xff]
    %v527 = vld [vmem:[%s514 + $0x60] sm:$0xff]
    %v528 = vld [vmem:[%s514 + $0x68] sm:$0xff]
    %v529 = vld [vmem:[%s514 + $0x70] sm:$0xff]
    %v530 = vld [vmem:[%s514 + $0x78] sm:$0xff]
    %531 = vmatprep.subr.mxu0 0.0
    %532 = vmatpush1.msra.mxu0 %v515
    %533 = vmatprep.subr.mxu0 0.0
    %534 = vmatpush1.msra.mxu0 %v516
    %535 = vmatprep.subr.mxu0 0.0
    %536 = vmatpush1.msra.mxu0 %v517
    %537 = vmatprep.subr.mxu0 0.0
    %538 = vmatpush1.msra.mxu0 %v518
    %539 = vmatprep.subr.mxu0 0.0
    %540 = vmatpush1.msra.mxu0 %v519
    %541 = vmatprep.subr.mxu0 0.0
    %542 = vmatpush1.msra.mxu0 %v520
    %543 = vmatprep.subr.mxu0 0.0
    %544 = vmatpush1.msra.mxu0 %v521
    %545 = vmatprep.subr.mxu0 0.0
    %546 = vmatpush1.msra.mxu0 %v522
    %547 = vmatprep.subr.mxu0 0.0
    %548 = vmatpush1.msra.mxu0 %v523
    %549 = vmatprep.subr.mxu0 0.0
    %550 = vmatpush1.msra.mxu0 %v524
    %551 = vmatprep.subr.mxu0 0.0
    %552 = vmatpush1.msra.mxu0 %v525
    %553 = vmatprep.subr.mxu0 0.0
    %554 = vmatpush1.msra.mxu0 %v526
    %555 = vmatprep.subr.mxu0 0.0
    %556 = vmatpush1.msra.mxu0 %v527
    %557 = vmatprep.subr.mxu0 0.0
    %558 = vmatpush1.msra.mxu0 %v528
    %559 = vmatprep.subr.mxu0 0.0
    %560 = vmatpush1.msra.mxu0 %v529
    %561 = vmatprep.subr.mxu0 0.0
    %562 = vmatpush1.msra.mxu0 %v530
    %563 = vmatprep.subr.mxu0 0.0
    %564 = vmatpush1.msra.mxu0 0.0
    %565 = vmatprep.subr.mxu0 0.0
    %566 = vmatpush1.msra.mxu0 0.0
    %567 = vmatprep.subr.mxu0 0.0
    %568 = vmatpush1.msra.mxu0 0.0
    %569 = vmatprep.subr.mxu0 0.0
    %570 = vmatpush1.msra.mxu0 0.0
    %571 = vmatprep.subr.mxu0 0.0
    %572 = vmatpush1.msra.mxu0 0.0
    %573 = vmatprep.subr.mxu0 0.0
    %574 = vmatpush1.msra.mxu0 0.0
    %575 = vmatprep.subr.mxu0 0.0
    %576 = vmatpush1.msra.mxu0 0.0
    %577 = vmatprep.subr.mxu0 0.0
    %578 = vmatpush1.msra.mxu0 0.0
    %579 = vmatprep.subr.mxu0 0.0
    %580 = vmatpush1.msra.mxu0 0.0
    %581 = vmatprep.subr.mxu0 0.0
    %582 = vmatpush1.msra.mxu0 0.0
    %583 = vmatprep.subr.mxu0 0.0
    %584 = vmatpush1.msra.mxu0 0.0
    %585 = vmatprep.subr.mxu0 0.0
    %586 = vmatpush1.msra.mxu0 0.0
    %587 = vmatprep.subr.mxu0 0.0
    %588 = vmatpush1.msra.mxu0 0.0
    %589 = vmatprep.subr.mxu0 0.0
    %590 = vmatpush1.msra.mxu0 0.0
    %591 = vmatprep.subr.mxu0 0.0
    %592 = vmatpush1.msra.mxu0 0.0
    %593 = vmatprep.subr.mxu0 0.0
    %594 = vmatpush1.msra.mxu0 0.0
    %595 = vmatprep.mubr.f32.mxu0 0.0
    %596 = vmatmul.mubr.f32.gmra.mrb[0].mxu0 %v513
    %v597 = vpop.f32.mrb[0].mxu0
    %v598 = vadd.f32 0.0, %v597
    %v599 = vpop.f32.mrb[0].mxu0
    %600 = vdwg.mxu0
    %v601 = vadd.f32 %v512, %v598
    %v602 = vmax.f32 %v601, 0.0
    %v603 = vld [vmem:[#allocation12] sm:$0xff]
    %s604 = scalar_lea.vmem [#allocation10], 256
    %v605 = vld [vmem:[%s604] sm:$0xff]
    %v606 = vld [vmem:[%s604 + $0x8] sm:$0xff]
    %v607 = vld [vmem:[%s604 + $0x10] sm:$0xff]
    %v608 = vld [vmem:[%s604 + $0x18] sm:$0xff]
    %v609 = vld [vmem:[%s604 + $0x20] sm:$0xff]
    %v610 = vld [vmem:[%s604 + $0x28] sm:$0xff]
    %v611 = vld [vmem:[%s604 + $0x30] sm:$0xff]
    %v612 = vld [vmem:[%s604 + $0x38] sm:$0xff]
    %v613 = vld [vmem:[%s604 + $0x40] sm:$0xff]
    %v614 = vld [vmem:[%s604 + $0x48] sm:$0xff]
    %v615 = vld [vmem:[%s604 + $0x50] sm:$0xff]
    %v616 = vld [vmem:[%s604 + $0x58] sm:$0xff]
    %v617 = vld [vmem:[%s604 + $0x60] sm:$0xff]
    %v618 = vld [vmem:[%s604 + $0x68] sm:$0xff]
    %v619 = vld [vmem:[%s604 + $0x70] sm:$0xff]
    %v620 = vld [vmem:[%s604 + $0x78] sm:$0xff]
    %621 = vmatprep.subr.mxu0 0.0
    %622 = vmatpush1.msra.mxu0 %v605
    %623 = vmatprep.subr.mxu0 0.0
    %624 = vmatpush1.msra.mxu0 %v606
    %625 = vmatprep.subr.mxu0 0.0
    %626 = vmatpush1.msra.mxu0 %v607
    %627 = vmatprep.subr.mxu0 0.0
    %628 = vmatpush1.msra.mxu0 %v608
    %629 = vmatprep.subr.mxu0 0.0
    %630 = vmatpush1.msra.mxu0 %v609
    %631 = vmatprep.subr.mxu0 0.0
    %632 = vmatpush1.msra.mxu0 %v610
    %633 = vmatprep.subr.mxu0 0.0
    %634 = vmatpush1.msra.mxu0 %v611
    %635 = vmatprep.subr.mxu0 0.0
    %636 = vmatpush1.msra.mxu0 %v612
    %637 = vmatprep.subr.mxu0 0.0
    %638 = vmatpush1.msra.mxu0 %v613
    %639 = vmatprep.subr.mxu0 0.0
    %640 = vmatpush1.msra.mxu0 %v614
    %641 = vmatprep.subr.mxu0 0.0
    %642 = vmatpush1.msra.mxu0 %v615
    %643 = vmatprep.subr.mxu0 0.0
    %644 = vmatpush1.msra.mxu0 %v616
    %645 = vmatprep.subr.mxu0 0.0
    %646 = vmatpush1.msra.mxu0 %v617
    %647 = vmatprep.subr.mxu0 0.0
    %648 = vmatpush1.msra.mxu0 %v618
    %649 = vmatprep.subr.mxu0 0.0
    %650 = vmatpush1.msra.mxu0 %v619
    %651 = vmatprep.subr.mxu0 0.0
    %652 = vmatpush1.msra.mxu0 %v620
    %653 = vmatprep.subr.mxu0 0.0
    %654 = vmatpush1.msra.mxu0 0.0
    %655 = vmatprep.subr.mxu0 0.0
    %656 = vmatpush1.msra.mxu0 0.0
    %657 = vmatprep.subr.mxu0 0.0
    %658 = vmatpush1.msra.mxu0 0.0
    %659 = vmatprep.subr.mxu0 0.0
    %660 = vmatpush1.msra.mxu0 0.0
    %661 = vmatprep.subr.mxu0 0.0
    %662 = vmatpush1.msra.mxu0 0.0
    %663 = vmatprep.subr.mxu0 0.0
    %664 = vmatpush1.msra.mxu0 0.0
    %665 = vmatprep.subr.mxu0 0.0
    %666 = vmatpush1.msra.mxu0 0.0
    %667 = vmatprep.subr.mxu0 0.0
    %668 = vmatpush1.msra.mxu0 0.0
    %669 = vmatprep.subr.mxu0 0.0
    %670 = vmatpush1.msra.mxu0 0.0
    %671 = vmatprep.subr.mxu0 0.0
    %672 = vmatpush1.msra.mxu0 0.0
    %673 = vmatprep.subr.mxu0 0.0
    %674 = vmatpush1.msra.mxu0 0.0
    %675 = vmatprep.subr.mxu0 0.0
    %676 = vmatpush1.msra.mxu0 0.0
    %677 = vmatprep.subr.mxu0 0.0
    %678 = vmatpush1.msra.mxu0 0.0
    %679 = vmatprep.subr.mxu0 0.0
    %680 = vmatpush1.msra.mxu0 0.0
    %681 = vmatprep.subr.mxu0 0.0
    %682 = vmatpush1.msra.mxu0 0.0
    %683 = vmatprep.subr.mxu0 0.0
    %684 = vmatpush1.msra.mxu0 0.0
    %685 = vmatprep.mubr.f32.mxu0 0.0
    %686 = vmatmul.mubr.f32.gmra.mrb[0].mxu0 %v602
    %v687 = vpop.f32.mrb[0].mxu0
    %v688 = vadd.f32 0.0, %v687
    %v689 = vpop.f32.mrb[0].mxu0
    %690 = vdwg.mxu0
    %v691 = vadd.f32 %v603, %v688
    %692 = vst [vmem:[#allocation12] sm:$0xff] %v691
    %693 = vst [vmem:[#allocation3] sm:$0xff] %v602
    %v694 = vld [vmem:[#allocation12] sm:$0xff]
    %v695 = vld [vmem:[%s4] sm:$0x1]
    %v697 = vlaneseq
    %v698 = vshrl.u32 %v697, 7
    %v699 = vsub.s32 0, %v698
    %v700 = vrot.slane %v695, %v699
    %v702 = vadd.f32 %v694, %v700
    %703 = vst [vmem:[#allocation12] sm:$0xff] %v702
    // Predicated region
    $region38: #{tpu_custom_call.1} parent=1 // pred_check
      _
    $region39: #{tpu_custom_call.1} parent=1 // pred_check_branch
      %705 = sbr.rel (0) target = $region41
    $region40: #{tpu_custom_call.1} parent=1 // pred_region
      %s707 = ssub.s32 128, 128
      %708 = vsyncadd [#allocation6], %s707
      %s710 = sshll.u32 [#allocation12], 4
      %s711 = int_to_ptr.vmem [resolvable:$true] %s710
      %713 = dma.vmem_to_hbm [thread:$0]  %s711, 128, %s5, [#allocation6]
    $region41: #{tpu_custom_call.1} parent=1 // pred_fallthru
      _
    // Predicated region
    $region42: #{tpu_custom_call.1} parent=1 // pred_check
      _
    $region43: #{tpu_custom_call.1} parent=1 // pred_check_branch
      %715 = sbr.rel (0) target = $region45
    $region44: #{tpu_custom_call.1} parent=1 // pred_region
      %716 = dma.done [#allocation6], 128
    $region45: #{tpu_custom_call.1} parent=1 // pred_fallthru
      _
    %717 = vsyncpa [#allocation5], 1
    %718 = vsyncpa [#allocation8], 1
    %719 = vsyncpa [#allocation11], 1
    %720 = vsyncpa [#allocation6], 1

</llo_original>
